<compile_context>
chip_gen: v7x
topology: tpu7x:2x2x1
jax: 0.10.0
libtpu: 0.0.40
codegen_flags: <defaults>
</compile_context>

<pallas_src>
import functools

import jax
import jax.numpy as jnp
from jax import lax
from jax.experimental import pallas as pl
from jax.experimental.pallas import tpu as pltpu


# ----------------------------------------------------------------------------
# Generation-aware VMEM budget (v5e/v6e: 128 MiB physical, v7x: 64 MiB).
# ----------------------------------------------------------------------------
def _vmem_budget():
    cap = 64 * 1024 * 1024
    try:
        info = pltpu.get_tpu_info()
        cap = int(getattr(info, "vmem_capacity_bytes", cap))
    except Exception:
        pass
    return int(cap * 3 // 4)  # leave headroom for Mosaic internal scratch


VMEM_LIMIT = _vmem_budget()


def _pick_tm(M, per_row_bytes, resident_bytes=0, budget=None):
    """Largest multiple-of-8 divisor of M (<=512) such that the streamed /
    temporary per-row working set plus the resident operands fit the budget."""
    if budget is None:
        budget = VMEM_LIMIT
    if M <= 8 or M % 8 != 0:
        return M
    avail = max(budget - resident_bytes, 0)
    cap = max(8, avail // max(per_row_bytes, 1))
    for cand in (512, 256, 128, 64, 32, 16, 8):
        if cand <= M and cand <= cap and M % cand == 0:
            return cand
    return 8


def _pick_ti(inter, cap=1024):
    """Inter-dim tile for the fused FFN: a lane-aligned divisor of `inter`."""
    if inter % 128 != 0:
        return inter
    for cand in (1024, 512, 256, 128):
        if cand <= min(inter, cap) and inter % cand == 0:
            return cand
    return inter


def _resident(block_shape, index_map):
    """BlockSpec for operands whose block index never changes (weights,
    biases, LN params): single-buffer them so they do not cost 2x VMEM."""
    try:
        return pl.BlockSpec(block_shape, index_map, pipeline_mode=pl.Buffered(1))
    except Exception:  # pipeline_mode / Buffered unavailable -> default spec
        return pl.BlockSpec(block_shape, index_map)


# ----------------------------------------------------------------------------
# Pallas kernels (bf16 MXU operands, f32 accumulation and LN/softmax math)
# ----------------------------------------------------------------------------
def _dense_kernel(x_ref, w_ref, b_ref, o_ref, *, activation):
    y = jnp.dot(x_ref[...], w_ref[...], preferred_element_type=jnp.float32)
    y = y + b_ref[...]
    if activation == "gelu":
        # TODO(synk): HF BERT uses exact (erf) GELU; tanh approximation here.
        y = jax.nn.gelu(y, approximate=True)
    elif activation == "tanh":
        y = jnp.tanh(y)
    o_ref[...] = y.astype(o_ref.dtype)


def _dense_add_ln_kernel(x_ref, w_ref, b_ref, r_ref, g_ref, bb_ref, o_ref, *, eps):
    # y = LayerNorm(x @ w + b + residual)
    y = jnp.dot(x_ref[...], w_ref[...], preferred_element_type=jnp.float32)
    h = y + b_ref[...] + r_ref[...].astype(jnp.float32)
    mu = jnp.mean(h, axis=-1, keepdims=True)
    var = jnp.mean(jnp.square(h - mu), axis=-1, keepdims=True)
    o_ref[...] = ((h - mu) * lax.rsqrt(var + eps) * g_ref[...]
                  + bb_ref[...]).astype(o_ref.dtype)


def _ffn_kernel(x_ref, w1_ref, b1_ref, w2_ref, b2_ref, g_ref, bb_ref,
                o_ref, acc_ref, *, eps):
    # Fused FFN: LayerNorm(x + gelu(x @ w1 + b1) @ w2 + b2).  The `inter`
    # dimension is the trailing reduction grid axis; the (tm, inter)
    # intermediate and the residual never leave VMEM.
    j = pl.program_id(1)

    @pl.when(j == 0)
    def _():
        acc_ref[...] = jnp.zeros_like(acc_ref)

    a = jnp.dot(x_ref[...], w1_ref[...], preferred_element_type=jnp.float32)
    # TODO(synk): HF BERT uses exact (erf) GELU; tanh approximation here.
    a = jax.nn.gelu(a + b1_ref[...], approximate=True)
    acc_ref[...] += jnp.dot(a.astype(jnp.bfloat16), w2_ref[...],
                            preferred_element_type=jnp.float32)

    @pl.when(j == pl.num_programs(1) - 1)
    def _():
        h = acc_ref[...] + b2_ref[...] + x_ref[...].astype(jnp.float32)
        mu = jnp.mean(h, axis=-1, keepdims=True)
        var = jnp.mean(jnp.square(h - mu), axis=-1, keepdims=True)
        o_ref[...] = ((h - mu) * lax.rsqrt(var + eps) * g_ref[...]
                      + bb_ref[...]).astype(o_ref.dtype)


def _ln_kernel(x_ref, g_ref, b_ref, o_ref, *, eps):
    h = x_ref[...].astype(jnp.float32)
    mu = jnp.mean(h, axis=-1, keepdims=True)
    var = jnp.mean(jnp.square(h - mu), axis=-1, keepdims=True)
    o_ref[...] = ((h - mu) * lax.rsqrt(var + eps) * g_ref[...]
                  + b_ref[...]).astype(o_ref.dtype)


def _mhsa_kernel(qkv_ref, o_ref, *, num_heads, scale):
    # One batch element per program.  The fused (S, 3D) QKV block stays packed
    # on the lane axis; q/k/v and head splits happen in-kernel (no XLA slices).
    x = qkv_ref[...]                                    # (S, 3D) bf16
    S, three_d = x.shape
    D = three_d // 3
    dh = D // num_heads
    for h in range(num_heads):                          # static head loop
        lo = h * dh
        # fold 1/sqrt(dh) into q (S*dh multiplies instead of S*S per head)
        q = (x[:, lo:lo + dh].astype(jnp.float32) * scale).astype(jnp.bfloat16)
        k = x[:, D + lo:D + lo + dh]
        v = x[:, 2 * D + lo:2 * D + lo + dh]
        s = lax.dot_general(q, k, (((1,), (1,)), ((), ())),   # no k transpose
                            preferred_element_type=jnp.float32)
        s = s - jnp.max(s, axis=-1, keepdims=True)
        p = jnp.exp(s)
        p = p * pl.reciprocal(jnp.sum(p, axis=-1, keepdims=True), approx=True)
        ctx = jnp.dot(p.astype(jnp.bfloat16), v,
                      preferred_element_type=jnp.float32)
        # per-head store straight into the output block (no concat relayout)
        o_ref[:, lo:lo + dh] = ctx.astype(o_ref.dtype)


def _pooler_cls_kernel(x_ref, wp_ref, bp_ref, wc_ref, bc_ref, o_ref):
    # pooled = tanh(cls @ Wp + bp);  logits = pooled @ Wc + bc  (one launch)
    p = jnp.tanh(jnp.dot(x_ref[...], wp_ref[...],
                         preferred_element_type=jnp.float32) + bp_ref[...])
    y = jnp.dot(p.astype(jnp.bfloat16), wc_ref[...],
                preferred_element_type=jnp.float32) + bc_ref[...]
    o_ref[...] = y.astype(o_ref.dtype)


# ----------------------------------------------------------------------------
# Pallas wrappers
# ----------------------------------------------------------------------------
def dense(x, w, b, activation="none", out_dtype=jnp.bfloat16):
    """y = act(x @ w + b); x:(M,K) bf16, w:(K,N) bf16, b:(1,N) f32."""
    M, K = x.shape
    K2, N = w.shape
    assert K == K2
    per_row = 4 * K + 8 * N          # bf16 x/out (double-buffered) + f32 temp
    resident = 2 * K * N + 8 * N     # single-buffered bf16 weight + bias
    tm = _pick_tm(M, per_row, resident)
    return pl.pallas_call(
        functools.partial(_dense_kernel, activation=activation),
        out_shape=jax.ShapeDtypeStruct((M, N), out_dtype),
        grid=(M // tm,),
        in_specs=[
            pl.BlockSpec((tm, K), lambda i: (i, 0)),
            _resident((K, N), lambda i: (0, 0)),
            _resident((1, N), lambda i: (0, 0)),
        ],
        out_specs=pl.BlockSpec((tm, N), lambda i: (i, 0)),
        compiler_params=pltpu.CompilerParams(
            dimension_semantics=("parallel",),
            vmem_limit_bytes=VMEM_LIMIT),
    )(x, w, b)


def dense_add_ln(x, w, b, residual, gamma, beta, eps=1e-12):
    """LayerNorm(x @ w + b + residual); matmul + residual + LN fused."""
    M, K = x.shape
    K2, N = w.shape
    assert K == K2 and residual.shape == (M, N)
    per_row = 4 * K + 16 * N
    resident = 2 * K * N + 24 * N
    tm = _pick_tm(M, per_row, resident)
    return pl.pallas_call(
        functools.partial(_dense_add_ln_kernel, eps=eps),
        out_shape=jax.ShapeDtypeStruct((M, N), jnp.bfloat16),
        grid=(M // tm,),
        in_specs=[
            pl.BlockSpec((tm, K), lambda i: (i, 0)),
            _resident((K, N), lambda i: (0, 0)),
            _resident((1, N), lambda i: (0, 0)),
            pl.BlockSpec((tm, N), lambda i: (i, 0)),
            _resident((1, N), lambda i: (0, 0)),
            _resident((1, N), lambda i: (0, 0)),
        ],
        out_specs=pl.BlockSpec((tm, N), lambda i: (i, 0)),
        compiler_params=pltpu.CompilerParams(
            dimension_semantics=("parallel",),
            vmem_limit_bytes=VMEM_LIMIT),
    )(x, w, b, residual, gamma, beta)


def ffn_add_ln(x, w1, b1, w2, b2, gamma, beta, eps=1e-12):
    """LayerNorm(x + FFN(x)) fused in a single pallas_call."""
    M, D = x.shape
    D2, inter = w1.shape
    assert D == D2 and w2.shape == (inter, D)
    ti = _pick_ti(inter)
    per_row = 12 * D + 8 * ti                 # x/out/acc tiles + f32 intermediate
    resident = 8 * D * ti + 16 * D + 8 * ti   # double-buffered w1/w2 tiles + params
    tm = _pick_tm(M, per_row, resident)
    return pl.pallas_call(
        functools.partial(_ffn_kernel, eps=eps),
        out_shape=jax.ShapeDtypeStruct((M, D), jnp.bfloat16),
        grid=(M // tm, inter // ti),
        in_specs=[
            pl.BlockSpec((tm, D), lambda i, j: (i, 0)),   # x (also the residual)
            pl.BlockSpec((D, ti), lambda i, j: (0, j)),   # w1 tile
            pl.BlockSpec((1, ti), lambda i, j: (0, j)),   # b1 tile
            pl.BlockSpec((ti, D), lambda i, j: (j, 0)),   # w2 tile
            _resident((1, D), lambda i, j: (0, 0)),       # b2
            _resident((1, D), lambda i, j: (0, 0)),       # gamma
            _resident((1, D), lambda i, j: (0, 0)),       # beta
        ],
        out_specs=pl.BlockSpec((tm, D), lambda i, j: (i, 0)),
        scratch_shapes=[pltpu.VMEM((tm, D), jnp.float32)],
        compiler_params=pltpu.CompilerParams(
            dimension_semantics=("parallel", "arbitrary"),
            vmem_limit_bytes=VMEM_LIMIT),
    )(x, w1, b1, w2, b2, gamma, beta)


def layernorm(x, gamma, beta, eps=1e-12):
    """LayerNorm(x) over the last dim; f32 in (embedding sums), bf16 out."""
    M, D = x.shape
    tm = _pick_tm(M, 16 * D, 16 * D)
    return pl.pallas_call(
        functools.partial(_ln_kernel, eps=eps),
        out_shape=jax.ShapeDtypeStruct((M, D), jnp.bfloat16),
        grid=(M // tm,),
        in_specs=[
            pl.BlockSpec((tm, D), lambda i: (i, 0)),
            _resident((1, D), lambda i: (0, 0)),
            _resident((1, D), lambda i: (0, 0)),
        ],
        out_specs=pl.BlockSpec((tm, D), lambda i: (i, 0)),
        compiler_params=pltpu.CompilerParams(
            dimension_semantics=("parallel",),
            vmem_limit_bytes=VMEM_LIMIT),
    )(x, gamma, beta)


def attention(qkv, num_heads):
    """Multi-head SDPA on the fused (B, S, 3D) QKV tensor; heads stay packed."""
    B, S, three_d = qkv.shape
    D = three_d // 3
    scale = 1.0 / float(D // num_heads) ** 0.5
    # TODO(synk): add a head / query-tile grid axis (v7x 2-core parallelism)
    # and flash-style KV tiling for long sequences.
    return pl.pallas_call(
        functools.partial(_mhsa_kernel, num_heads=num_heads, scale=scale),
        out_shape=jax.ShapeDtypeStruct((B, S, D), jnp.bfloat16),
        grid=(B,),
        in_specs=[pl.BlockSpec((None, S, three_d), lambda b: (b, 0, 0))],
        out_specs=pl.BlockSpec((None, S, D), lambda b: (b, 0, 0)),
        compiler_params=pltpu.CompilerParams(
            dimension_semantics=("parallel",),
            vmem_limit_bytes=VMEM_LIMIT),
    )(qkv)


def pooler_classifier(cls_tok, wp, bp, wc, bc):
    """Fused pooler (dense+tanh) + classifier head; logits in f32."""
    B, _ = cls_tok.shape
    C = wc.shape[1]
    return pl.pallas_call(
        _pooler_cls_kernel,
        out_shape=jax.ShapeDtypeStruct((B, C), jnp.float32),
        compiler_params=pltpu.CompilerParams(vmem_limit_bytes=VMEM_LIMIT),
    )(cls_tok, wp, bp, wc, bc)


# ----------------------------------------------------------------------------
# Parameter init (deterministic, synthetic -- shapes follow a small BERT)
# ----------------------------------------------------------------------------
def init_params(key, *, vocab, max_pos, D, H, layers, inter, n_classes):
    def nrm(k, shape):
        return 0.02 * jax.random.normal(k, shape, dtype=jnp.float32)

    def w16(k, shape):                      # bf16 weight storage (MXU-native)
        return nrm(k, shape).astype(jnp.bfloat16)

    keys = jax.random.split(key, 8 + 12 * layers)
    ki = iter(keys)
    params = {
        "word_emb": nrm(next(ki), (vocab, D)),
        "pos_emb": nrm(next(ki), (max_pos, D)),
        "type_emb": nrm(next(ki), (2, D)),
        "emb_ln_g": jnp.ones((1, D), jnp.float32),
        "emb_ln_b": jnp.zeros((1, D), jnp.float32),
        "pooler_w": w16(next(ki), (D, D)),
        "pooler_b": jnp.zeros((1, D), jnp.float32),
        "cls_w": w16(next(ki), (D, n_classes)),
        "cls_b": jnp.zeros((1, n_classes), jnp.float32),
        "layers": [],
    }
    for _ in range(layers):
        wq = nrm(next(ki), (D, D))
        wk = nrm(next(ki), (D, D))
        wv = nrm(next(ki), (D, D))
        layer = {
            # fused QKV projection weight (D, 3D)
            "wqkv": jnp.concatenate([wq, wk, wv], axis=1).astype(jnp.bfloat16),
            "bqkv": jnp.zeros((1, 3 * D), jnp.float32),
            "wo": w16(next(ki), (D, D)), "bo": jnp.zeros((1, D), jnp.float32),
            "ln1_g": jnp.ones((1, D), jnp.float32),
            "ln1_b": jnp.zeros((1, D), jnp.float32),
            "w1": w16(next(ki), (D, inter)), "b1": jnp.zeros((1, inter), jnp.float32),
            "w2": w16(next(ki), (inter, D)), "b2": jnp.zeros((1, D), jnp.float32),
            "ln2_g": jnp.ones((1, D), jnp.float32),
            "ln2_b": jnp.zeros((1, D), jnp.float32),
        }
        params["layers"].append(layer)
    return params


# ----------------------------------------------------------------------------
# Forward pass (glue in JAX, hot path in Pallas kernels)
# ----------------------------------------------------------------------------
def transformer_classifier_forward(params, token_ids, *, num_heads):
    B, S = token_ids.shape
    D = params["word_emb"].shape[1]

    # Embedding gathers stay in plain JAX glue (f32 sums), LN in Pallas -> bf16
    emb = (jnp.take(params["word_emb"], token_ids, axis=0)
           + params["pos_emb"][:S][None, :, :]
           + params["type_emb"][0][None, None, :])
    h = layernorm(emb.reshape(B * S, D), params["emb_ln_g"], params["emb_ln_b"])

    for lyr in params["layers"]:
        # fused Q|K|V projection -> (B, S, 3D) bf16, passed whole to attention
        qkv = dense(h, lyr["wqkv"], lyr["bqkv"]).reshape(B, S, 3 * D)
        ctx = attention(qkv, num_heads).reshape(B * S, D)
        # attention output projection + residual + LayerNorm fused
        h = dense_add_ln(ctx, lyr["wo"], lyr["bo"], h, lyr["ln1_g"], lyr["ln1_b"])
        # fully fused FFN + residual + LayerNorm (intermediate never hits HBM)
        h = ffn_add_ln(h, lyr["w1"], lyr["b1"], lyr["w2"], lyr["b2"],
                       lyr["ln2_g"], lyr["ln2_b"])

    # Pooler (CLS token, dense+tanh) + classifier head, fused in one kernel.
    # Dropout is identity in eval mode.
    cls = h.reshape(B, S, D)[:, 0, :]
    logits = pooler_classifier(cls, params["pooler_w"], params["pooler_b"],
                               params["cls_w"], params["cls_b"])
    return logits  # (B, num_classes) f32


# ----------------------------------------------------------------------------
if __name__ == "__main__":
    B, S = 2, 8            # batch of 2 "texts", padded/truncated to seq len 8
    D, H, LAYERS, INTER = 32, 2, 2, 64
    VOCAB, MAX_POS, NUM_CLASSES = 100, 64, 3

    root = jax.random.PRNGKey(0)
    k_params, k_ids = jax.random.split(root)
    params = init_params(k_params, vocab=VOCAB, max_pos=MAX_POS, D=D, H=H,
                         layers=LAYERS, inter=INTER, n_classes=NUM_CLASSES)
    token_ids = jax.random.randint(k_ids, (B, S), 0, VOCAB, dtype=jnp.int32)

    fwd = jax.jit(functools.partial(transformer_classifier_forward, num_heads=H))
    logits = fwd(params, token_ids)
    jax.block_until_ready(logits)
    assert logits.shape == (B, NUM_CLASSES)
    print("KERNEL_OK")
</pallas_src>

<mosaic_0001>
module attributes {stable_mosaic.version = 11 : i64} {
  func.func @_ln_kernel(%arg0: i32, %arg1: memref<16x32xf32, #tpu.memory_space<vmem>>, %arg2: memref<1x32xf32, #tpu.memory_space<vmem>>, %arg3: memref<1x32xf32, #tpu.memory_space<vmem>>, %arg4: memref<16x32xbf16, #tpu.memory_space<vmem>>) attributes {dimension_semantics = [#tpu.dimension_semantics<parallel>], iteration_bounds = array<i64: 1>, scalar_prefetch = 0 : i64, scratch_operands = 0 : i64, tpu.core_type = #tpu.core_type<tc>, window_params = [{transform_indices = @transform_0, window_bounds = array<i64: 16, 32>}, {pipeline_mode = #tpu.pipeline_mode<synchronous>, transform_indices = @transform_1, window_bounds = array<i64: 1, 32>}, {pipeline_mode = #tpu.pipeline_mode<synchronous>, transform_indices = @transform_2, window_bounds = array<i64: 1, 32>}, {transform_indices = @transform_3, window_bounds = array<i64: 16, 32>}]} {
    %c0 = arith.constant 0 : index
    %c0_0 = arith.constant 0 : index
    %0 = vector.load %arg1[%c0, %c0_0] : memref<16x32xf32, #tpu.memory_space<vmem>>, vector<16x32xf32>
    %cst = arith.constant dense<0.000000e+00> : vector<16xf32>
    %1 = vector.multi_reduction <add>, %0, %cst [1] : vector<16x32xf32> to vector<16xf32>
    %2 = vector.shape_cast %1 : vector<16xf32> to vector<16x1xf32>
    %cst_1 = arith.constant 3.200000e+01 : f32
    %3 = vector.broadcast %cst_1 : f32 to vector<16x1xf32>
    %4 = arith.divf %2, %3 : vector<16x1xf32>
    %5 = vector.broadcast %4 : vector<16x1xf32> to vector<16x32xf32>
    %6 = arith.subf %0, %5 : vector<16x32xf32>
    %7 = arith.mulf %6, %6 : vector<16x32xf32>
    %cst_2 = arith.constant dense<0.000000e+00> : vector<16xf32>
    %8 = vector.multi_reduction <add>, %7, %cst_2 [1] : vector<16x32xf32> to vector<16xf32>
    %9 = vector.shape_cast %8 : vector<16xf32> to vector<16x1xf32>
    %cst_3 = arith.constant 3.200000e+01 : f32
    %10 = vector.broadcast %cst_3 : f32 to vector<16x1xf32>
    %11 = arith.divf %9, %10 : vector<16x1xf32>
    %12 = vector.broadcast %4 : vector<16x1xf32> to vector<16x32xf32>
    %13 = arith.subf %0, %12 : vector<16x32xf32>
    %cst_4 = arith.constant 9.99999996E-13 : f32
    %14 = vector.broadcast %cst_4 : f32 to vector<16x1xf32>
    %15 = arith.addf %11, %14 : vector<16x1xf32>
    %16 = math.rsqrt %15 : vector<16x1xf32>
    %17 = vector.broadcast %16 : vector<16x1xf32> to vector<16x32xf32>
    %18 = arith.mulf %13, %17 : vector<16x32xf32>
    %c0_5 = arith.constant 0 : index
    %c0_6 = arith.constant 0 : index
    %19 = vector.load %arg2[%c0_5, %c0_6] : memref<1x32xf32, #tpu.memory_space<vmem>>, vector<1x32xf32>
    %20 = vector.broadcast %19 : vector<1x32xf32> to vector<16x32xf32>
    %21 = arith.mulf %18, %20 : vector<16x32xf32>
    %c0_7 = arith.constant 0 : index
    %c0_8 = arith.constant 0 : index
    %22 = vector.load %arg3[%c0_7, %c0_8] : memref<1x32xf32, #tpu.memory_space<vmem>>, vector<1x32xf32>
    %23 = vector.broadcast %22 : vector<1x32xf32> to vector<16x32xf32>
    %24 = arith.addf %21, %23 : vector<16x32xf32>
    %25 = arith.truncf %24 : vector<16x32xf32> to vector<16x32xbf16>
    %c0_9 = arith.constant 0 : index
    %c0_10 = arith.constant 0 : index
    %26 = vector.load %arg4[%c0_9, %c0_10] : memref<16x32xbf16, #tpu.memory_space<vmem>>, vector<16x32xbf16>
    tpu.vector_store %arg4[%c0_9, %c0_10], %25 {strides = array<i32>} : memref<16x32xbf16, #tpu.memory_space<vmem>>, vector<16x32xbf16>,
    return
  }
  func.func @transform_0(%arg0: i32) -> (i32, i32) {
    %c0_i32 = arith.constant 0 : i32
    %c0_i32_0 = arith.constant 0 : i32
    return %arg0, %c0_i32 : i32, i32
  }
  func.func @transform_1(%arg0: i32) -> (i32, i32) {
    %c0_i32 = arith.constant 0 : i32
    %c0_i32_0 = arith.constant 0 : i32
    %c0_i32_1 = arith.constant 0 : i32
    return %c0_i32, %c0_i32_0 : i32, i32
  }
  func.func @transform_2(%arg0: i32) -> (i32, i32) {
    %c0_i32 = arith.constant 0 : i32
    %c0_i32_0 = arith.constant 0 : i32
    %c0_i32_1 = arith.constant 0 : i32
    return %c0_i32, %c0_i32_0 : i32, i32
  }
  func.func @transform_3(%arg0: i32) -> (i32, i32) {
    %c0_i32 = arith.constant 0 : i32
    %c0_i32_0 = arith.constant 0 : i32
    return %arg0, %c0_i32 : i32, i32
  }
}

module attributes {stable_mosaic.version = 11 : i64} {
  func.func @_dense_kernel(%arg0: i32, %arg1: memref<16x32xbf16, #tpu.memory_space<vmem>>, %arg2: memref<32x96xbf16, #tpu.memory_space<vmem>>, %arg3: memref<1x96xf32, #tpu.memory_space<vmem>>, %arg4: memref<16x96xbf16, #tpu.memory_space<vmem>>) attributes {dimension_semantics = [#tpu.dimension_semantics<parallel>], iteration_bounds = array<i64: 1>, scalar_prefetch = 0 : i64, scratch_operands = 0 : i64, tpu.core_type = #tpu.core_type<tc>, window_params = [{transform_indices = @transform_0, window_bounds = array<i64: 16, 32>}, {pipeline_mode = #tpu.pipeline_mode<synchronous>, transform_indices = @transform_1, window_bounds = array<i64: 32, 96>}, {pipeline_mode = #tpu.pipeline_mode<synchronous>, transform_indices = @transform_2, window_bounds = array<i64: 1, 96>}, {transform_indices = @transform_3, window_bounds = array<i64: 16, 96>}]} {
    %c0 = arith.constant 0 : index
    %c0_0 = arith.constant 0 : index
    %0 = vector.load %arg1[%c0, %c0_0] : memref<16x32xbf16, #tpu.memory_space<vmem>>, vector<16x32xbf16>
    %c0_1 = arith.constant 0 : index
    %c0_2 = arith.constant 0 : index
    %1 = vector.load %arg2[%c0_1, %c0_2] : memref<32x96xbf16, #tpu.memory_space<vmem>>, vector<32x96xbf16>
    %cst = arith.constant dense<0.000000e+00> : vector<16x96xf32>
    %2 = tpu.matmul %0, %1, %cst {dimension_numbers = #tpu.dot_dimension_numbers<[1], [0], [0], [1], [0, 0, 1, 1], [], []>} : vector<16x32xbf16>, vector<32x96xbf16>, vector<16x96xf32> -> vector<16x96xf32>
    %c0_3 = arith.constant 0 : index
    %c0_4 = arith.constant 0 : index
    %3 = vector.load %arg3[%c0_3, %c0_4] : memref<1x96xf32, #tpu.memory_space<vmem>>, vector<1x96xf32>
    %4 = vector.broadcast %3 : vector<1x96xf32> to vector<16x96xf32>
    %5 = arith.addf %2, %4 : vector<16x96xf32>
    %6 = arith.truncf %5 : vector<16x96xf32> to vector<16x96xbf16>
    %c0_5 = arith.constant 0 : index
    %c0_6 = arith.constant 0 : index
    %7 = vector.load %arg4[%c0_5, %c0_6] : memref<16x96xbf16, #tpu.memory_space<vmem>>, vector<16x96xbf16>
    tpu.vector_store %arg4[%c0_5, %c0_6], %6 {strides = array<i32>} : memref<16x96xbf16, #tpu.memory_space<vmem>>, vector<16x96xbf16>,
    return
  }
  func.func @transform_0(%arg0: i32) -> (i32, i32) {
    %c0_i32 = arith.constant 0 : i32
    %c0_i32_0 = arith.constant 0 : i32
    return %arg0, %c0_i32 : i32, i32
  }
  func.func @transform_1(%arg0: i32) -> (i32, i32) {
    %c0_i32 = arith.constant 0 : i32
    %c0_i32_0 = arith.constant 0 : i32
    %c0_i32_1 = arith.constant 0 : i32
    return %c0_i32, %c0_i32_0 : i32, i32
  }
  func.func @transform_2(%arg0: i32) -> (i32, i32) {
    %c0_i32 = arith.constant 0 : i32
    %c0_i32_0 = arith.constant 0 : i32
    %c0_i32_1 = arith.constant 0 : i32
    return %c0_i32, %c0_i32_0 : i32, i32
  }
  func.func @transform_3(%arg0: i32) -> (i32, i32) {
    %c0_i32 = arith.constant 0 : i32
    %c0_i32_0 = arith.constant 0 : i32
    return %arg0, %c0_i32 : i32, i32
  }
}

module attributes {stable_mosaic.version = 11 : i64} {
  func.func @_mhsa_kernel(%arg0: i32, %arg1: memref<1x8x96xbf16, #tpu.memory_space<vmem>>, %arg2: memref<1x8x32xbf16, #tpu.memory_space<vmem>>) attributes {dimension_semantics = [#tpu.dimension_semantics<parallel>], iteration_bounds = array<i64: 2>, scalar_prefetch = 0 : i64, scratch_operands = 0 : i64, tpu.core_type = #tpu.core_type<tc>, window_params = [{transform_indices = @transform_0, window_bounds = array<i64: 1, 8, 96>}, {transform_indices = @transform_1, window_bounds = array<i64: 1, 8, 32>}]} {
    %c0 = arith.constant 0 : index
    %c0_0 = arith.constant 0 : index
    %c0_1 = arith.constant 0 : index
    %0 = vector.load %arg1[%c0, %c0_0, %c0_1] : memref<1x8x96xbf16, #tpu.memory_space<vmem>>, vector<1x8x96xbf16>
    %1 = vector.shape_cast %0 : vector<1x8x96xbf16> to vector<8x96xbf16>
    %2 = vector.extract_strided_slice %1 {offsets = [0, 0], sizes = [8, 16], strides = [1, 1]} : vector<8x96xbf16> to vector<8x16xbf16>
    %3 = arith.extf %2 : vector<8x16xbf16> to vector<8x16xf32>
    %cst = arith.constant 2.500000e-01 : f32
    %4 = vector.broadcast %cst : f32 to vector<8x16xf32>
    %5 = arith.mulf %3, %4 : vector<8x16xf32>
    %6 = arith.truncf %5 : vector<8x16xf32> to vector<8x16xbf16>
    %7 = vector.extract_strided_slice %1 {offsets = [0, 32], sizes = [8, 16], strides = [1, 1]} : vector<8x96xbf16> to vector<8x16xbf16>
    %8 = vector.extract_strided_slice %1 {offsets = [0, 64], sizes = [8, 16], strides = [1, 1]} : vector<8x96xbf16> to vector<8x16xbf16>
    %cst_2 = arith.constant dense<0.000000e+00> : vector<8x8xf32>
    %9 = tpu.matmul %6, %7, %cst_2 {dimension_numbers = #tpu.dot_dimension_numbers<[1], [1], [0], [0], [0, 0, 1, 0], [], []>} : vector<8x16xbf16>, vector<8x16xbf16>, vector<8x8xf32> -> vector<8x8xf32>
    %cst_3 = arith.constant dense<0xFF800000> : vector<8xf32>
    %10 = vector.multi_reduction <maximumf>, %9, %cst_3 [1] : vector<8x8xf32> to vector<8xf32>
    %11 = vector.shape_cast %10 : vector<8xf32> to vector<8x1xf32>
    %12 = vector.broadcast %11 : vector<8x1xf32> to vector<8x8xf32>
    %13 = arith.subf %9, %12 : vector<8x8xf32>
    %14 = math.exp %13 : vector<8x8xf32>
    %cst_4 = arith.constant dense<0.000000e+00> : vector<8xf32>
    %15 = vector.multi_reduction <add>, %14, %cst_4 [1] : vector<8x8xf32> to vector<8xf32>
    %16 = vector.shape_cast %15 : vector<8xf32> to vector<8x1xf32>
    %17 = tpu.reciprocal %16 {approx = true} : vector<8x1xf32> -> vector<8x1xf32>
    %18 = vector.broadcast %17 : vector<8x1xf32> to vector<8x8xf32>
    %19 = arith.mulf %14, %18 : vector<8x8xf32>
    %20 = arith.truncf %19 : vector<8x8xf32> to vector<8x8xbf16>
    %cst_5 = arith.constant dense<0.000000e+00> : vector<8x16xf32>
    %21 = tpu.matmul %20, %8, %cst_5 {dimension_numbers = #tpu.dot_dimension_numbers<[1], [0], [0], [1], [0, 0, 1, 1], [], []>} : vector<8x8xbf16>, vector<8x16xbf16>, vector<8x16xf32> -> vector<8x16xf32>
    %22 = arith.truncf %21 : vector<8x16xf32> to vector<8x16xbf16>
    %c0_6 = arith.constant 0 : index
    %c0_7 = arith.constant 0 : index
    %c0_8 = arith.constant 0 : index
    %23 = vector.load %arg2[%c0_6, %c0_7, %c0_8] : memref<1x8x32xbf16, #tpu.memory_space<vmem>>, vector<1x8x16xbf16>
    %24 = vector.shape_cast %23 : vector<1x8x16xbf16> to vector<8x16xbf16>
    %25 = vector.shape_cast %22 : vector<8x16xbf16> to vector<1x8x16xbf16>
    tpu.vector_store %arg2[%c0_6, %c0_7, %c0_8], %25 {strides = array<i32>} : memref<1x8x32xbf16, #tpu.memory_space<vmem>>, vector<1x8x16xbf16>,
    %26 = vector.extract_strided_slice %1 {offsets = [0, 16], sizes = [8, 16], strides = [1, 1]} : vector<8x96xbf16> to vector<8x16xbf16>
    %27 = arith.extf %26 : vector<8x16xbf16> to vector<8x16xf32>
    %cst_9 = arith.constant 2.500000e-01 : f32
    %28 = vector.broadcast %cst_9 : f32 to vector<8x16xf32>
    %29 = arith.mulf %27, %28 : vector<8x16xf32>
    %30 = arith.truncf %29 : vector<8x16xf32> to vector<8x16xbf16>
    %31 = vector.extract_strided_slice %1 {offsets = [0, 48], sizes = [8, 16], strides = [1, 1]} : vector<8x96xbf16> to vector<8x16xbf16>
    %32 = vector.extract_strided_slice %1 {offsets = [0, 80], sizes = [8, 16], strides = [1, 1]} : vector<8x96xbf16> to vector<8x16xbf16>
    %cst_10 = arith.constant dense<0.000000e+00> : vector<8x8xf32>
    %33 = tpu.matmul %30, %31, %cst_10 {dimension_numbers = #tpu.dot_dimension_numbers<[1], [1], [0], [0], [0, 0, 1, 0], [], []>} : vector<8x16xbf16>, vector<8x16xbf16>, vector<8x8xf32> -> vector<8x8xf32>
    %cst_11 = arith.constant dense<0xFF800000> : vector<8xf32>
    %34 = vector.multi_reduction <maximumf>, %33, %cst_11 [1] : vector<8x8xf32> to vector<8xf32>
    %35 = vector.shape_cast %34 : vector<8xf32> to vector<8x1xf32>
    %36 = vector.broadcast %35 : vector<8x1xf32> to vector<8x8xf32>
    %37 = arith.subf %33, %36 : vector<8x8xf32>
    %38 = math.exp %37 : vector<8x8xf32>
    %cst_12 = arith.constant dense<0.000000e+00> : vector<8xf32>
    %39 = vector.multi_reduction <add>, %38, %cst_12 [1] : vector<8x8xf32> to vector<8xf32>
    %40 = vector.shape_cast %39 : vector<8xf32> to vector<8x1xf32>
    %41 = tpu.reciprocal %40 {approx = true} : vector<8x1xf32> -> vector<8x1xf32>
    %42 = vector.broadcast %41 : vector<8x1xf32> to vector<8x8xf32>
    %43 = arith.mulf %38, %42 : vector<8x8xf32>
    %44 = arith.truncf %43 : vector<8x8xf32> to vector<8x8xbf16>
    %cst_13 = arith.constant dense<0.000000e+00> : vector<8x16xf32>
    %45 = tpu.matmul %44, %32, %cst_13 {dimension_numbers = #tpu.dot_dimension_numbers<[1], [0], [0], [1], [0, 0, 1, 1], [], []>} : vector<8x8xbf16>, vector<8x16xbf16>, vector<8x16xf32> -> vector<8x16xf32>
    %46 = arith.truncf %45 : vector<8x16xf32> to vector<8x16xbf16>
    %c0_14 = arith.constant 0 : index
    %c0_15 = arith.constant 0 : index
    %c16 = arith.constant 16 : index
    %47 = vector.load %arg2[%c0_14, %c0_15, %c16] : memref<1x8x32xbf16, #tpu.memory_space<vmem>>, vector<1x8x16xbf16>
    %48 = vector.shape_cast %47 : vector<1x8x16xbf16> to vector<8x16xbf16>
    %49 = vector.shape_cast %46 : vector<8x16xbf16> to vector<1x8x16xbf16>
    tpu.vector_store %arg2[%c0_14, %c0_15, %c16], %49 {strides = array<i32>} : memref<1x8x32xbf16, #tpu.memory_space<vmem>>, vector<1x8x16xbf16>,
    return
  }
  func.func @transform_0(%arg0: i32) -> (i32, i32, i32) {
    %c0_i32 = arith.constant 0 : i32
    %c0_i32_0 = arith.constant 0 : i32
    %c0_i32_1 = arith.constant 0 : i32
    return %arg0, %c0_i32, %c0_i32_0 : i32, i32, i32
  }
  func.func @transform_1(%arg0: i32) -> (i32, i32, i32) {
    %c0_i32 = arith.constant 0 : i32
    %c0_i32_0 = arith.constant 0 : i32
    %c0_i32_1 = arith.constant 0 : i32
    return %arg0, %c0_i32, %c0_i32_0 : i32, i32, i32
  }
}

module attributes {stable_mosaic.version = 11 : i64} {
  func.func @_dense_add_ln_kernel(%arg0: i32, %arg1: memref<16x32xbf16, #tpu.memory_space<vmem>>, %arg2: memref<32x32xbf16, #tpu.memory_space<vmem>>, %arg3: memref<1x32xf32, #tpu.memory_space<vmem>>, %arg4: memref<16x32xbf16, #tpu.memory_space<vmem>>, %arg5: memref<1x32xf32, #tpu.memory_space<vmem>>, %arg6: memref<1x32xf32, #tpu.memory_space<vmem>>, %arg7: memref<16x32xbf16, #tpu.memory_space<vmem>>) attributes {dimension_semantics = [#tpu.dimension_semantics<parallel>], iteration_bounds = array<i64: 1>, scalar_prefetch = 0 : i64, scratch_operands = 0 : i64, tpu.core_type = #tpu.core_type<tc>, window_params = [{transform_indices = @transform_0, window_bounds = array<i64: 16, 32>}, {pipeline_mode = #tpu.pipeline_mode<synchronous>, transform_indices = @transform_1, window_bounds = array<i64: 32, 32>}, {pipeline_mode = #tpu.pipeline_mode<synchronous>, transform_indices = @transform_2, window_bounds = array<i64: 1, 32>}, {transform_indices = @transform_3, window_bounds = array<i64: 16, 32>}, {pipeline_mode = #tpu.pipeline_mode<synchronous>, transform_indices = @transform_4, window_bounds = array<i64: 1, 32>}, {pipeline_mode = #tpu.pipeline_mode<synchronous>, transform_indices = @transform_5, window_bounds = array<i64: 1, 32>}, {transform_indices = @transform_6, window_bounds = array<i64: 16, 32>}]} {
    %c0 = arith.constant 0 : index
    %c0_0 = arith.constant 0 : index
    %0 = vector.load %arg1[%c0, %c0_0] : memref<16x32xbf16, #tpu.memory_space<vmem>>, vector<16x32xbf16>
    %c0_1 = arith.constant 0 : index
    %c0_2 = arith.constant 0 : index
    %1 = vector.load %arg2[%c0_1, %c0_2] : memref<32x32xbf16, #tpu.memory_space<vmem>>, vector<32x32xbf16>
    %cst = arith.constant dense<0.000000e+00> : vector<16x32xf32>
    %2 = tpu.matmul %0, %1, %cst {dimension_numbers = #tpu.dot_dimension_numbers<[1], [0], [0], [1], [0, 0, 1, 1], [], []>} : vector<16x32xbf16>, vector<32x32xbf16>, vector<16x32xf32> -> vector<16x32xf32>
    %c0_3 = arith.constant 0 : index
    %c0_4 = arith.constant 0 : index
    %3 = vector.load %arg3[%c0_3, %c0_4] : memref<1x32xf32, #tpu.memory_space<vmem>>, vector<1x32xf32>
    %4 = vector.broadcast %3 : vector<1x32xf32> to vector<16x32xf32>
    %5 = arith.addf %2, %4 : vector<16x32xf32>
    %c0_5 = arith.constant 0 : index
    %c0_6 = arith.constant 0 : index
    %6 = vector.load %arg4[%c0_5, %c0_6] : memref<16x32xbf16, #tpu.memory_space<vmem>>, vector<16x32xbf16>
    %7 = arith.extf %6 : vector<16x32xbf16> to vector<16x32xf32>
    %8 = arith.addf %5, %7 : vector<16x32xf32>
    %cst_7 = arith.constant dense<0.000000e+00> : vector<16xf32>
    %9 = vector.multi_reduction <add>, %8, %cst_7 [1] : vector<16x32xf32> to vector<16xf32>
    %10 = vector.shape_cast %9 : vector<16xf32> to vector<16x1xf32>
    %cst_8 = arith.constant 3.200000e+01 : f32
    %11 = vector.broadcast %cst_8 : f32 to vector<16x1xf32>
    %12 = arith.divf %10, %11 : vector<16x1xf32>
    %13 = vector.broadcast %12 : vector<16x1xf32> to vector<16x32xf32>
    %14 = arith.subf %8, %13 : vector<16x32xf32>
    %15 = arith.mulf %14, %14 : vector<16x32xf32>
    %cst_9 = arith.constant dense<0.000000e+00> : vector<16xf32>
    %16 = vector.multi_reduction <add>, %15, %cst_9 [1] : vector<16x32xf32> to vector<16xf32>
    %17 = vector.shape_cast %16 : vector<16xf32> to vector<16x1xf32>
    %cst_10 = arith.constant 3.200000e+01 : f32
    %18 = vector.broadcast %cst_10 : f32 to vector<16x1xf32>
    %19 = arith.divf %17, %18 : vector<16x1xf32>
    %20 = vector.broadcast %12 : vector<16x1xf32> to vector<16x32xf32>
    %21 = arith.subf %8, %20 : vector<16x32xf32>
    %cst_11 = arith.constant 9.99999996E-13 : f32
    %22 = vector.broadcast %cst_11 : f32 to vector<16x1xf32>
    %23 = arith.addf %19, %22 : vector<16x1xf32>
    %24 = math.rsqrt %23 : vector<16x1xf32>
    %25 = vector.broadcast %24 : vector<16x1xf32> to vector<16x32xf32>
    %26 = arith.mulf %21, %25 : vector<16x32xf32>
    %c0_12 = arith.constant 0 : index
    %c0_13 = arith.constant 0 : index
    %27 = vector.load %arg5[%c0_12, %c0_13] : memref<1x32xf32, #tpu.memory_space<vmem>>, vector<1x32xf32>
    %28 = vector.broadcast %27 : vector<1x32xf32> to vector<16x32xf32>
    %29 = arith.mulf %26, %28 : vector<16x32xf32>
    %c0_14 = arith.constant 0 : index
    %c0_15 = arith.constant 0 : index
    %30 = vector.load %arg6[%c0_14, %c0_15] : memref<1x32xf32, #tpu.memory_space<vmem>>, vector<1x32xf32>
    %31 = vector.broadcast %30 : vector<1x32xf32> to vector<16x32xf32>
    %32 = arith.addf %29, %31 : vector<16x32xf32>
    %33 = arith.truncf %32 : vector<16x32xf32> to vector<16x32xbf16>
    %c0_16 = arith.constant 0 : index
    %c0_17 = arith.constant 0 : index
    %34 = vector.load %arg7[%c0_16, %c0_17] : memref<16x32xbf16, #tpu.memory_space<vmem>>, vector<16x32xbf16>
    tpu.vector_store %arg7[%c0_16, %c0_17], %33 {strides = array<i32>} : memref<16x32xbf16, #tpu.memory_space<vmem>>, vector<16x32xbf16>,
    return
  }
  func.func @transform_0(%arg0: i32) -> (i32, i32) {
    %c0_i32 = arith.constant 0 : i32
    %c0_i32_0 = arith.constant 0 : i32
    return %arg0, %c0_i32 : i32, i32
  }
  func.func @transform_1(%arg0: i32) -> (i32, i32) {
    %c0_i32 = arith.constant 0 : i32
    %c0_i32_0 = arith.constant 0 : i32
    %c0_i32_1 = arith.constant 0 : i32
    return %c0_i32, %c0_i32_0 : i32, i32
  }
  func.func @transform_2(%arg0: i32) -> (i32, i32) {
    %c0_i32 = arith.constant 0 : i32
    %c0_i32_0 = arith.constant 0 : i32
    %c0_i32_1 = arith.constant 0 : i32
    return %c0_i32, %c0_i32_0 : i32, i32
  }
  func.func @transform_3(%arg0: i32) -> (i32, i32) {
    %c0_i32 = arith.constant 0 : i32
    %c0_i32_0 = arith.constant 0 : i32
    return %arg0, %c0_i32 : i32, i32
  }
  func.func @transform_4(%arg0: i32) -> (i32, i32) {
    %c0_i32 = arith.constant 0 : i32
    %c0_i32_0 = arith.constant 0 : i32
    %c0_i32_1 = arith.constant 0 : i32
    return %c0_i32, %c0_i32_0 : i32, i32
  }
  func.func @transform_5(%arg0: i32) -> (i32, i32) {
    %c0_i32 = arith.constant 0 : i32
    %c0_i32_0 = arith.constant 0 : i32
    %c0_i32_1 = arith.constant 0 : i32
    return %c0_i32, %c0_i32_0 : i32, i32
  }
  func.func @transform_6(%arg0: i32) -> (i32, i32) {
    %c0_i32 = arith.constant 0 : i32
    %c0_i32_0 = arith.constant 0 : i32
    return %arg0, %c0_i32 : i32, i32
  }
}

module attributes {stable_mosaic.version = 11 : i64} {
  func.func @_ffn_kernel(%arg0: i32, %arg1: i32, %arg2: memref<16x32xbf16, #tpu.memory_space<vmem>>, %arg3: memref<32x64xbf16, #tpu.memory_space<vmem>>, %arg4: memref<1x64xf32, #tpu.memory_space<vmem>>, %arg5: memref<64x32xbf16, #tpu.memory_space<vmem>>, %arg6: memref<1x32xf32, #tpu.memory_space<vmem>>, %arg7: memref<1x32xf32, #tpu.memory_space<vmem>>, %arg8: memref<1x32xf32, #tpu.memory_space<vmem>>, %arg9: memref<16x32xbf16, #tpu.memory_space<vmem>>, %arg10: memref<16x32xf32, #tpu.memory_space<vmem>>) attributes {dimension_semantics = [#tpu.dimension_semantics<parallel>, #tpu.dimension_semantics<arbitrary>], iteration_bounds = array<i64: 1, 1>, scalar_prefetch = 0 : i64, scratch_operands = 1 : i64, tpu.core_type = #tpu.core_type<tc>, window_params = [{transform_indices = @transform_0, window_bounds = array<i64: 16, 32>}, {transform_indices = @transform_1, window_bounds = array<i64: 32, 64>}, {transform_indices = @transform_2, window_bounds = array<i64: 1, 64>}, {transform_indices = @transform_3, window_bounds = array<i64: 64, 32>}, {pipeline_mode = #tpu.pipeline_mode<synchronous>, transform_indices = @transform_4, window_bounds = array<i64: 1, 32>}, {pipeline_mode = #tpu.pipeline_mode<synchronous>, transform_indices = @transform_5, window_bounds = array<i64: 1, 32>}, {pipeline_mode = #tpu.pipeline_mode<synchronous>, transform_indices = @transform_6, window_bounds = array<i64: 1, 32>}, {transform_indices = @transform_7, window_bounds = array<i64: 16, 32>}]} {
    %c0_i32 = arith.constant 0 : i32
    %0 = arith.cmpi eq, %arg1, %c0_i32 : i32
    %1 = arith.extui %0 : i1 to i32
    %c0_i32_0 = arith.constant 0 : i32
    %2 = arith.cmpi ne, %1, %c0_i32_0 : i32
    scf.if %2 {
      %cst_19 = arith.constant 0.000000e+00 : f32
      %31 = vector.broadcast %cst_19 : f32 to vector<16x32xf32>
      %c0_20 = arith.constant 0 : index
      %c0_21 = arith.constant 0 : index
      %32 = vector.load %arg10[%c0_20, %c0_21] : memref<16x32xf32, #tpu.memory_space<vmem>>, vector<16x32xf32>
      tpu.vector_store %arg10[%c0_20, %c0_21], %31 {strides = array<i32>} : memref<16x32xf32, #tpu.memory_space<vmem>>, vector<16x32xf32>,
    } else {
    }
    %c0 = arith.constant 0 : index
    %c0_1 = arith.constant 0 : index
    %3 = vector.load %arg2[%c0, %c0_1] : memref<16x32xbf16, #tpu.memory_space<vmem>>, vector<16x32xbf16>
    %c0_2 = arith.constant 0 : index
    %c0_3 = arith.constant 0 : index
    %4 = vector.load %arg3[%c0_2, %c0_3] : memref<32x64xbf16, #tpu.memory_space<vmem>>, vector<32x64xbf16>
    %cst = arith.constant dense<0.000000e+00> : vector<16x64xf32>
    %5 = tpu.matmul %3, %4, %cst {dimension_numbers = #tpu.dot_dimension_numbers<[1], [0], [0], [1], [0, 0, 1, 1], [], []>} : vector<16x32xbf16>, vector<32x64xbf16>, vector<16x64xf32> -> vector<16x64xf32>
    %c0_4 = arith.constant 0 : index
    %c0_5 = arith.constant 0 : index
    %6 = vector.load %arg4[%c0_4, %c0_5] : memref<1x64xf32, #tpu.memory_space<vmem>>, vector<1x64xf32>
    %7 = vector.broadcast %6 : vector<1x64xf32> to vector<16x64xf32>
    %8 = arith.addf %5, %7 : vector<16x64xf32>
    %9 = arith.mulf %8, %8 : vector<16x64xf32>
    %10 = arith.mulf %8, %9 : vector<16x64xf32>
    %cst_6 = arith.constant 4.471500e-02 : f32
    %11 = vector.broadcast %cst_6 : f32 to vector<16x64xf32>
    %12 = arith.mulf %11, %10 : vector<16x64xf32>
    %13 = arith.addf %8, %12 : vector<16x64xf32>
    %cst_7 = arith.constant 0.797884583 : f32
    %14 = vector.broadcast %cst_7 : f32 to vector<16x64xf32>
    %15 = arith.mulf %14, %13 : vector<16x64xf32>
    %16 = math.tanh %15 : vector<16x64xf32>
    %cst_8 = arith.constant 1.000000e+00 : f32
    %17 = vector.broadcast %cst_8 : f32 to vector<16x64xf32>
    %18 = arith.addf %17, %16 : vector<16x64xf32>
    %cst_9 = arith.constant 5.000000e-01 : f32
    %19 = vector.broadcast %cst_9 : f32 to vector<16x64xf32>
    %20 = arith.mulf %19, %18 : vector<16x64xf32>
    %21 = arith.mulf %8, %20 : vector<16x64xf32>
    %c0_10 = arith.constant 0 : index
    %c0_11 = arith.constant 0 : index
    %22 = vector.load %arg10[%c0_10, %c0_11] : memref<16x32xf32, #tpu.memory_space<vmem>>, vector<16x32xf32>
    %23 = arith.truncf %21 : vector<16x64xf32> to vector<16x64xbf16>
    %c0_12 = arith.constant 0 : index
    %c0_13 = arith.constant 0 : index
    %24 = vector.load %arg5[%c0_12, %c0_13] : memref<64x32xbf16, #tpu.memory_space<vmem>>, vector<64x32xbf16>
    %cst_14 = arith.constant dense<0.000000e+00> : vector<16x32xf32>
    %25 = tpu.matmul %23, %24, %cst_14 {dimension_numbers = #tpu.dot_dimension_numbers<[1], [0], [0], [1], [0, 0, 1, 1], [], []>} : vector<16x64xbf16>, vector<64x32xbf16>, vector<16x32xf32> -> vector<16x32xf32>
    %26 = arith.addf %22, %25 : vector<16x32xf32>
    %c0_15 = arith.constant 0 : index
    %c0_16 = arith.constant 0 : index
    %27 = vector.load %arg10[%c0_15, %c0_16] : memref<16x32xf32, #tpu.memory_space<vmem>>, vector<16x32xf32>
    tpu.vector_store %arg10[%c0_15, %c0_16], %26 {strides = array<i32>} : memref<16x32xf32, #tpu.memory_space<vmem>>, vector<16x32xf32>,
    %c0_i32_17 = arith.constant 0 : i32
    %28 = arith.cmpi eq, %arg1, %c0_i32_17 : i32
    %29 = arith.extui %28 : i1 to i32
    %c0_i32_18 = arith.constant 0 : i32
    %30 = arith.cmpi ne, %29, %c0_i32_18 : i32
    scf.if %30 {
      %c0_19 = arith.constant 0 : index
      %c0_20 = arith.constant 0 : index
      %31 = vector.load %arg10[%c0_19, %c0_20] : memref<16x32xf32, #tpu.memory_space<vmem>>, vector<16x32xf32>
      %c0_21 = arith.constant 0 : index
      %c0_22 = arith.constant 0 : index
      %32 = vector.load %arg6[%c0_21, %c0_22] : memref<1x32xf32, #tpu.memory_space<vmem>>, vector<1x32xf32>
      %33 = vector.broadcast %32 : vector<1x32xf32> to vector<16x32xf32>
      %34 = arith.addf %31, %33 : vector<16x32xf32>
      %c0_23 = arith.constant 0 : index
      %c0_24 = arith.constant 0 : index
      %35 = vector.load %arg2[%c0_23, %c0_24] : memref<16x32xbf16, #tpu.memory_space<vmem>>, vector<16x32xbf16>
      %36 = arith.extf %35 : vector<16x32xbf16> to vector<16x32xf32>
      %37 = arith.addf %34, %36 : vector<16x32xf32>
      %cst_25 = arith.constant dense<0.000000e+00> : vector<16xf32>
      %38 = vector.multi_reduction <add>, %37, %cst_25 [1] : vector<16x32xf32> to vector<16xf32>
      %39 = vector.shape_cast %38 : vector<16xf32> to vector<16x1xf32>
      %cst_26 = arith.constant 3.200000e+01 : f32
      %40 = vector.broadcast %cst_26 : f32 to vector<16x1xf32>
      %41 = arith.divf %39, %40 : vector<16x1xf32>
      %42 = vector.broadcast %41 : vector<16x1xf32> to vector<16x32xf32>
      %43 = arith.subf %37, %42 : vector<16x32xf32>
      %44 = arith.mulf %43, %43 : vector<16x32xf32>
      %cst_27 = arith.constant dense<0.000000e+00> : vector<16xf32>
      %45 = vector.multi_reduction <add>, %44, %cst_27 [1] : vector<16x32xf32> to vector<16xf32>
      %46 = vector.shape_cast %45 : vector<16xf32> to vector<16x1xf32>
      %cst_28 = arith.constant 3.200000e+01 : f32
      %47 = vector.broadcast %cst_28 : f32 to vector<16x1xf32>
      %48 = arith.divf %46, %47 : vector<16x1xf32>
      %49 = vector.broadcast %41 : vector<16x1xf32> to vector<16x32xf32>
      %50 = arith.subf %37, %49 : vector<16x32xf32>
      %cst_29 = arith.constant 9.99999996E-13 : f32
      %51 = vector.broadcast %cst_29 : f32 to vector<16x1xf32>
      %52 = arith.addf %48, %51 : vector<16x1xf32>
      %53 = math.rsqrt %52 : vector<16x1xf32>
      %54 = vector.broadcast %53 : vector<16x1xf32> to vector<16x32xf32>
      %55 = arith.mulf %50, %54 : vector<16x32xf32>
      %c0_30 = arith.constant 0 : index
      %c0_31 = arith.constant 0 : index
      %56 = vector.load %arg7[%c0_30, %c0_31] : memref<1x32xf32, #tpu.memory_space<vmem>>, vector<1x32xf32>
      %57 = vector.broadcast %56 : vector<1x32xf32> to vector<16x32xf32>
      %58 = arith.mulf %55, %57 : vector<16x32xf32>
      %c0_32 = arith.constant 0 : index
      %c0_33 = arith.constant 0 : index
      %59 = vector.load %arg8[%c0_32, %c0_33] : memref<1x32xf32, #tpu.memory_space<vmem>>, vector<1x32xf32>
      %60 = vector.broadcast %59 : vector<1x32xf32> to vector<16x32xf32>
      %61 = arith.addf %58, %60 : vector<16x32xf32>
      %62 = arith.truncf %61 : vector<16x32xf32> to vector<16x32xbf16>
      %c0_34 = arith.constant 0 : index
      %c0_35 = arith.constant 0 : index
      %63 = vector.load %arg9[%c0_34, %c0_35] : memref<16x32xbf16, #tpu.memory_space<vmem>>, vector<16x32xbf16>
      tpu.vector_store %arg9[%c0_34, %c0_35], %62 {strides = array<i32>} : memref<16x32xbf16, #tpu.memory_space<vmem>>, vector<16x32xbf16>,
    } else {
    }
    return
  }
  func.func @transform_0(%arg0: i32, %arg1: i32) -> (i32, i32) {
    %c0_i32 = arith.constant 0 : i32
    %c0_i32_0 = arith.constant 0 : i32
    return %arg0, %c0_i32 : i32, i32
  }
  func.func @transform_1(%arg0: i32, %arg1: i32) -> (i32, i32) {
    %c0_i32 = arith.constant 0 : i32
    %c0_i32_0 = arith.constant 0 : i32
    return %c0_i32, %arg1 : i32, i32
  }
  func.func @transform_2(%arg0: i32, %arg1: i32) -> (i32, i32) {
    %c0_i32 = arith.constant 0 : i32
    %c0_i32_0 = arith.constant 0 : i32
    return %c0_i32, %arg1 : i32, i32
  }
  func.func @transform_3(%arg0: i32, %arg1: i32) -> (i32, i32) {
    %c0_i32 = arith.constant 0 : i32
    %c0_i32_0 = arith.constant 0 : i32
    return %arg1, %c0_i32 : i32, i32
  }
  func.func @transform_4(%arg0: i32, %arg1: i32) -> (i32, i32) {
    %c0_i32 = arith.constant 0 : i32
    %c0_i32_0 = arith.constant 0 : i32
    %c0_i32_1 = arith.constant 0 : i32
    return %c0_i32, %c0_i32_0 : i32, i32
  }
  func.func @transform_5(%arg0: i32, %arg1: i32) -> (i32, i32) {
    %c0_i32 = arith.constant 0 : i32
    %c0_i32_0 = arith.constant 0 : i32
    %c0_i32_1 = arith.constant 0 : i32
    return %c0_i32, %c0_i32_0 : i32, i32
  }
  func.func @transform_6(%arg0: i32, %arg1: i32) -> (i32, i32) {
    %c0_i32 = arith.constant 0 : i32
    %c0_i32_0 = arith.constant 0 : i32
    %c0_i32_1 = arith.constant 0 : i32
    return %c0_i32, %c0_i32_0 : i32, i32
  }
  func.func @transform_7(%arg0: i32, %arg1: i32) -> (i32, i32) {
    %c0_i32 = arith.constant 0 : i32
    %c0_i32_0 = arith.constant 0 : i32
    return %arg0, %c0_i32 : i32, i32
  }
}

module attributes {stable_mosaic.version = 11 : i64} {
  func.func @_pooler_cls_kernel(%arg0: memref<2x32xbf16, #tpu.memory_space<vmem>>, %arg1: memref<32x32xbf16, #tpu.memory_space<vmem>>, %arg2: memref<1x32xf32, #tpu.memory_space<vmem>>, %arg3: memref<32x3xbf16, #tpu.memory_space<vmem>>, %arg4: memref<1x3xf32, #tpu.memory_space<vmem>>, %arg5: memref<2x3xf32, #tpu.memory_space<vmem>>) attributes {dimension_semantics = [], scalar_prefetch = 0 : i64, scratch_operands = 0 : i64, tpu.core_type = #tpu.core_type<tc>} {
    %c0 = arith.constant 0 : index
    %c0_0 = arith.constant 0 : index
    %0 = vector.load %arg0[%c0, %c0_0] : memref<2x32xbf16, #tpu.memory_space<vmem>>, vector<2x32xbf16>
    %c0_1 = arith.constant 0 : index
    %c0_2 = arith.constant 0 : index
    %1 = vector.load %arg1[%c0_1, %c0_2] : memref<32x32xbf16, #tpu.memory_space<vmem>>, vector<32x32xbf16>
    %cst = arith.constant dense<0.000000e+00> : vector<2x32xf32>
    %2 = tpu.matmul %0, %1, %cst {dimension_numbers = #tpu.dot_dimension_numbers<[1], [0], [0], [1], [0, 0, 1, 1], [], []>} : vector<2x32xbf16>, vector<32x32xbf16>, vector<2x32xf32> -> vector<2x32xf32>
    %c0_3 = arith.constant 0 : index
    %c0_4 = arith.constant 0 : index
    %3 = vector.load %arg2[%c0_3, %c0_4] : memref<1x32xf32, #tpu.memory_space<vmem>>, vector<1x32xf32>
    %4 = vector.broadcast %3 : vector<1x32xf32> to vector<2x32xf32>
    %5 = arith.addf %2, %4 : vector<2x32xf32>
    %6 = math.tanh %5 : vector<2x32xf32>
    %7 = arith.truncf %6 : vector<2x32xf32> to vector<2x32xbf16>
    %c0_5 = arith.constant 0 : index
    %c0_6 = arith.constant 0 : index
    %8 = vector.load %arg3[%c0_5, %c0_6] : memref<32x3xbf16, #tpu.memory_space<vmem>>, vector<32x3xbf16>
    %cst_7 = arith.constant dense<0.000000e+00> : vector<2x3xf32>
    %9 = tpu.matmul %7, %8, %cst_7 {dimension_numbers = #tpu.dot_dimension_numbers<[1], [0], [0], [1], [0, 0, 1, 1], [], []>} : vector<2x32xbf16>, vector<32x3xbf16>, vector<2x3xf32> -> vector<2x3xf32>
    %c0_8 = arith.constant 0 : index
    %c0_9 = arith.constant 0 : index
    %10 = vector.load %arg4[%c0_8, %c0_9] : memref<1x3xf32, #tpu.memory_space<vmem>>, vector<1x3xf32>
    %11 = vector.broadcast %10 : vector<1x3xf32> to vector<2x3xf32>
    %12 = arith.addf %9, %11 : vector<2x3xf32>
    %c0_10 = arith.constant 0 : index
    %c0_11 = arith.constant 0 : index
    %13 = vector.load %arg5[%c0_10, %c0_11] : memref<2x3xf32, #tpu.memory_space<vmem>>, vector<2x3xf32>
    tpu.vector_store %arg5[%c0_10, %c0_11], %12 {strides = array<i32>} : memref<2x3xf32, #tpu.memory_space<vmem>>, vector<2x3xf32>,
    return
  }
}

</mosaic_0001>

<llo_original>
// kernel: transformer_classifier_forward.10
$region0: #{transformer_classifier_forward.10}
  #allocation0 [shape = 'u32[]', space=smem, size = 0x4, offset = 0x4, fixed_abs, tag = 'smem constant byte address 0x4 - core index']
  #allocation1 [shape = 'u32[144,128]{1,0:T(1,128)}', space=vmem, size = 0x12000, scoped, tag = 'internal scratch']
  %s0 = inlined_call_operand.vmem [shape: f32[16,32], index: 0, kind: input, shape index: {}]
  %s1 = inlined_call_operand.vmem [shape: f32[1,32], index: 1, kind: input, shape index: {}]
  %s2 = inlined_call_operand.vmem [shape: f32[1,32], index: 2, kind: input, shape index: {}]
  %s3 = inlined_call_operand.vmem [shape: bf16[16,32], index: 3, kind: output, shape index: {}]
  %s4 = sld [smem:[#allocation0]]
  $region22: #{transformer_classifier_forward.10} parent=0
    _
  %s6 = ssub.s32 1, %s4
  %s7 = scalar_select 0, %s6, %s4
  // Predicated region
  $region2: #{transformer_classifier_forward.10} parent=0 // pred_check
    _
  $region3: #{transformer_classifier_forward.10} parent=0 // pred_check_branch
    %9 = sbr.rel (0) target = $region5
  $region4: #{transformer_classifier_forward.10} parent=0 // pred_region
    _
  $region5: #{transformer_classifier_forward.10} parent=0 // pred_fallthru
    _
  // Predicated region
  $region6: #{transformer_classifier_forward.10} parent=0 // pred_check
    _
  $region7: #{transformer_classifier_forward.10} parent=0 // pred_check_branch
    %11 = sbr.rel (0) target = $region9
  $region8: #{transformer_classifier_forward.10} parent=0 // pred_region
    _
  $region9: #{transformer_classifier_forward.10} parent=0 // pred_fallthru
    _
  // Predicated region
  $region10: #{transformer_classifier_forward.10} parent=0 // pred_check
    _
  $region11: #{transformer_classifier_forward.10} parent=0 // pred_check_branch
    %13 = sbr.rel (0) target = $region13
  $region12: #{transformer_classifier_forward.10} parent=0 // pred_region
    _
  $region13: #{transformer_classifier_forward.10} parent=0 // pred_fallthru
    _
  %v14 = vld [vmem:[%s0] sm:$0xff]
  %v15 = vld [vmem:[%s0 + $0x8] sm:$0xff]
  %vm16 = vcmask 261120
  %v17 = vsel %vm16, %v14, 0.0
  %18 = vadd.xlane.f32.xlu0 %v17
  %v19 = vpop.xlane.xlu0 %18
  %v20 = vsel %vm16, %v15, 0.0
  %21 = vadd.xlane.f32.xlu0 %v20
  %v22 = vpop.xlane.xlu0 %21
  %v23 = vrcp.pop 32.0
  %v24 = vmul.f32 %v19, %v23
  %v25 = vmul.f32 %v22, %v23
  %v26 = vsub.f32 %v14, %v24
  %v27 = vsub.f32 %v15, %v25
  %v28 = vmul.f32 %v26, %v26
  %v29 = vmul.f32 %v27, %v27
  %v30 = vsel %vm16, %v28, 0.0
  %31 = vadd.xlane.f32.xlu0 %v30
  %v32 = vpop.xlane.xlu0 %31
  %v33 = vsel %vm16, %v29, 0.0
  %34 = vadd.xlane.f32.xlu0 %v33
  %v35 = vpop.xlane.xlu0 %34
  %v36 = vmul.f32 %v32, %v23
  %v37 = vmul.f32 %v35, %v23
  %v38 = vadd.f32 %v36, 1e-12
  %v39 = vadd.f32 %v37, 1e-12
  %v40 = vrsqrt.pop %v38
  %v41 = vrsqrt.pop %v39
  %v42 = vmul.f32 %v26, %v40
  %v43 = vmul.f32 %v27, %v41
  %v44 = vld [vmem:[%s1] sm:$0x1]
  %v46 = vlaneseq
  %v47 = vshrl.u32 %v46, 7
  %v48 = vsub.s32 0, %v47
  %v49 = vrot.slane %v44, %v48
  %v51 = vmul.f32 %v42, %v49
  %v52 = vmul.f32 %v43, %v49
  %v53 = vld [vmem:[%s2] sm:$0x1]
  %v55 = vlaneseq
  %v56 = vshrl.u32 %v55, 7
  %v57 = vsub.s32 0, %v56
  %v58 = vrot.slane %v53, %v57
  %v60 = vadd.f32 %v51, %v58
  %v61 = vadd.f32 %v52, %v58
  %v62 = vpack.c.bf16 %v61, %v60
  %v64 = vunpack.c.l.b16 %v62
  %v65 = vunpack.c.h.b16 %v62
  %v66 = vpack.c.b16 %v64, %v64
  %v67 = vpack.c.b16 %v65, %v65
  %vm70 = vcmask 257024
  %71 = vst.msk [vmem:[%s3] sm:$0xf] %vm70, %v66
  %72 = vst.msk [vmem:[%s3 + $0x4] sm:$0xf] %vm70, %v67
  // Predicated region
  $region14: #{transformer_classifier_forward.10} parent=0 // pred_check
    _
  $region15: #{transformer_classifier_forward.10} parent=0 // pred_check_branch
    %74 = sbr.rel (0) target = $region17
  $region16: #{transformer_classifier_forward.10} parent=0 // pred_region
    _
  $region17: #{transformer_classifier_forward.10} parent=0 // pred_fallthru
    _
  // Predicated region
  $region18: #{transformer_classifier_forward.10} parent=0 // pred_check
    _
  $region19: #{transformer_classifier_forward.10} parent=0 // pred_check_branch
    %76 = sbr.rel (0) target = $region21
  $region20: #{transformer_classifier_forward.10} parent=0 // pred_region
    _
  $region21: #{transformer_classifier_forward.10} parent=0 // pred_fallthru
    _

// kernel: transformer_classifier_forward.11
$region0: #{transformer_classifier_forward.11}
  #allocation0 [shape = 'u32[]', space=smem, size = 0x4, offset = 0x4, fixed_abs, tag = 'smem constant byte address 0x4 - core index']
  #allocation1 [shape = 'u32[144,128]{1,0:T(1,128)}', space=vmem, size = 0x12000, scoped, tag = 'internal scratch']
  %s0 = inlined_call_operand.vmem [shape: bf16[16,32], index: 0, kind: input, shape index: {}]
  %s1 = inlined_call_operand.vmem [shape: bf16[32,96], index: 1, kind: input, shape index: {}]
  %s2 = inlined_call_operand.vmem [shape: f32[1,96], index: 2, kind: input, shape index: {}]
  %s3 = inlined_call_operand.vmem [shape: bf16[16,96], index: 3, kind: output, shape index: {}]
  %s4 = sld [smem:[#allocation0]]
  $region22: #{transformer_classifier_forward.11} parent=0
    _
  %s6 = ssub.s32 1, %s4
  %s7 = scalar_select 0, %s6, %s4
  // Predicated region
  $region2: #{transformer_classifier_forward.11} parent=0 // pred_check
    _
  $region3: #{transformer_classifier_forward.11} parent=0 // pred_check_branch
    %9 = sbr.rel (0) target = $region5
  $region4: #{transformer_classifier_forward.11} parent=0 // pred_region
    _
  $region5: #{transformer_classifier_forward.11} parent=0 // pred_fallthru
    _
  // Predicated region
  $region6: #{transformer_classifier_forward.11} parent=0 // pred_check
    _
  $region7: #{transformer_classifier_forward.11} parent=0 // pred_check_branch
    %11 = sbr.rel (0) target = $region9
  $region8: #{transformer_classifier_forward.11} parent=0 // pred_region
    _
  $region9: #{transformer_classifier_forward.11} parent=0 // pred_fallthru
    _
  // Predicated region
  $region10: #{transformer_classifier_forward.11} parent=0 // pred_check
    _
  $region11: #{transformer_classifier_forward.11} parent=0 // pred_check_branch
    %13 = sbr.rel (0) target = $region13
  $region12: #{transformer_classifier_forward.11} parent=0 // pred_region
    _
  $region13: #{transformer_classifier_forward.11} parent=0 // pred_fallthru
    _
  %v15 = vld [vmem:[%s0] sm:$0xf]
  %v16 = vld [vmem:[%s0 + $0x4] sm:$0xf]
  %v17 = vld [vmem:[%s1] sm:$0xf]
  %v18 = vld [vmem:[%s1 + $0x4] sm:$0xf]
  %v19 = vld [vmem:[%s1 + $0x8] sm:$0xf]
  %v20 = vld [vmem:[%s1 + $0xc] sm:$0xf]
  %v21 = vld [vmem:[%s2] sm:$0x1]
  %v23 = vlaneseq
  %v24 = vshrl.u32 %v23, 7
  %v25 = vsub.s32 0, %v24
  %v26 = vrot.slane %v21, %v25
  %v30 = vunpack.c.l.b16 %v15
  %v31 = vunpack.c.l.b16 %v16
  %v32 = vpack.c.b16 %v31, %v30
  %v37 = vunpack.c.l.b16 %v17
  %v38 = vunpack.c.l.b16 %v18
  %v39 = vunpack.c.l.b16 %v19
  %v40 = vunpack.c.l.b16 %v20
  %v41 = vpack.c.b16 %v38, %v37
  %v42 = vpack.c.b16 %v40, %v39
  %vm45 = vcmask 261120
  %v47 = vsel %vm45, %v32, 0
  %49 = vmatprep.subr.bf16.mxu0 0
  %50 = vmatpush1.bf16.msra.mxu0 %v41
  %51 = vmatprep.subr.bf16.mxu0 0
  %52 = vmatpush1.bf16.msra.mxu0 %v42
  %53 = vmatprep.subr.bf16.mxu0 0
  %54 = vmatpush1.bf16.msra.mxu0 0
  %55 = vmatprep.subr.bf16.mxu0 0
  %56 = vmatpush1.bf16.msra.mxu0 0
  %57 = vmatprep.subr.bf16.mxu0 0
  %58 = vmatpush1.bf16.msra.mxu0 0
  %59 = vmatprep.subr.bf16.mxu0 0
  %60 = vmatpush1.bf16.msra.mxu0 0
  %61 = vmatprep.subr.bf16.mxu0 0
  %62 = vmatpush1.bf16.msra.mxu0 0
  %63 = vmatprep.subr.bf16.mxu0 0
  %64 = vmatpush1.bf16.msra.mxu0 0
  %65 = vmatprep.subr.bf16.mxu0 0
  %66 = vmatpush1.bf16.msra.mxu0 0
  %67 = vmatprep.subr.bf16.mxu0 0
  %68 = vmatpush1.bf16.msra.mxu0 0
  %69 = vmatprep.subr.bf16.mxu0 0
  %70 = vmatpush1.bf16.msra.mxu0 0
  %71 = vmatprep.subr.bf16.mxu0 0
  %72 = vmatpush1.bf16.msra.mxu0 0
  %73 = vmatprep.subr.bf16.mxu0 0
  %74 = vmatpush1.bf16.msra.mxu0 0
  %75 = vmatprep.subr.bf16.mxu0 0
  %76 = vmatpush1.bf16.msra.mxu0 0
  %77 = vmatprep.subr.bf16.mxu0 0
  %78 = vmatpush1.bf16.msra.mxu0 0
  %79 = vmatprep.subr.bf16.mxu0 0
  %80 = vmatpush1.bf16.msra.mxu0 0
  %81 = vmatprep.mubr.bf16.mxu0 0
  %82 = vmatmul.mubr.bf16.gmra.mrb[0].mxu0 %v47
  %v83 = vpop.f32.mrb[0].mxu0
  %v84 = vadd.f32 %v26, %v83
  %v85 = vpop.f32.mrb[0].mxu0
  %v86 = vpop.f32.mrb[0].mxu0
  %v87 = vadd.f32 %v26, %v86
  %v88 = vpop.f32.mrb[0].mxu0
  %89 = vdwg.mxu0
  %v90 = vpack.c.bf16 %v87, %v84
  %v92 = vunpack.c.l.b16 %v90
  %v93 = vunpack.c.h.b16 %v90
  %v94 = vpack.c.b16 %v92, %v92
  %v95 = vpack.c.b16 %v93, %v93
  %vm98 = vcmask 781312
  %99 = vst.msk [vmem:[%s3] sm:$0xf] %vm98, %v94
  %100 = vst.msk [vmem:[%s3 + $0x4] sm:$0xf] %vm98, %v95
  // Predicated region
  $region14: #{transformer_classifier_forward.11} parent=0 // pred_check
    _
  $region15: #{transformer_classifier_forward.11} parent=0 // pred_check_branch
    %102 = sbr.rel (0) target = $region17
  $region16: #{transformer_classifier_forward.11} parent=0 // pred_region
    _
  $region17: #{transformer_classifier_forward.11} parent=0 // pred_fallthru
    _
  // Predicated region
  $region18: #{transformer_classifier_forward.11} parent=0 // pred_check
    _
  $region19: #{transformer_classifier_forward.11} parent=0 // pred_check_branch
    %104 = sbr.rel (0) target = $region21
  $region20: #{transformer_classifier_forward.11} parent=0 // pred_region
    _
  $region21: #{transformer_classifier_forward.11} parent=0 // pred_fallthru
    _

// kernel: transformer_classifier_forward.13
$region0: #{transformer_classifier_forward.13}
  #allocation0 [shape = 'u32[]', space=smem, size = 0x4, offset = 0x4, fixed_abs, tag = 'smem constant byte address 0x4 - core index']
  #allocation1 [shape = 'u32[144,128]{1,0:T(1,128)}', space=vmem, size = 0x12000, scoped, tag = 'internal scratch']
  %s0 = inlined_call_operand.vmem [shape: bf16[16,32], index: 0, kind: input, shape index: {}]
  %s1 = inlined_call_operand.vmem [shape: bf16[32,32], index: 1, kind: input, shape index: {}]
  %s2 = inlined_call_operand.vmem [shape: f32[1,32], index: 2, kind: input, shape index: {}]
  %s3 = inlined_call_operand.vmem [shape: bf16[16,32], index: 3, kind: input, shape index: {}]
  %s4 = inlined_call_operand.vmem [shape: f32[1,32], index: 4, kind: input, shape index: {}]
  %s5 = inlined_call_operand.vmem [shape: f32[1,32], index: 5, kind: input, shape index: {}]
  %s6 = inlined_call_operand.vmem [shape: bf16[16,32], index: 6, kind: output, shape index: {}]
  %s7 = sld [smem:[#allocation0]]
  $region34: #{transformer_classifier_forward.13} parent=0
    _
  %s9 = ssub.s32 1, %s7
  %s10 = scalar_select 0, %s9, %s7
  // Predicated region
  $region2: #{transformer_classifier_forward.13} parent=0 // pred_check
    _
  $region3: #{transformer_classifier_forward.13} parent=0 // pred_check_branch
    %12 = sbr.rel (0) target = $region5
  $region4: #{transformer_classifier_forward.13} parent=0 // pred_region
    _
  $region5: #{transformer_classifier_forward.13} parent=0 // pred_fallthru
    _
  // Predicated region
  $region6: #{transformer_classifier_forward.13} parent=0 // pred_check
    _
  $region7: #{transformer_classifier_forward.13} parent=0 // pred_check_branch
    %14 = sbr.rel (0) target = $region9
  $region8: #{transformer_classifier_forward.13} parent=0 // pred_region
    _
  $region9: #{transformer_classifier_forward.13} parent=0 // pred_fallthru
    _
  // Predicated region
  $region10: #{transformer_classifier_forward.13} parent=0 // pred_check
    _
  $region11: #{transformer_classifier_forward.13} parent=0 // pred_check_branch
    %16 = sbr.rel (0) target = $region13
  $region12: #{transformer_classifier_forward.13} parent=0 // pred_region
    _
  $region13: #{transformer_classifier_forward.13} parent=0 // pred_fallthru
    _
  // Predicated region
  $region14: #{transformer_classifier_forward.13} parent=0 // pred_check
    _
  $region15: #{transformer_classifier_forward.13} parent=0 // pred_check_branch
    %18 = sbr.rel (0) target = $region17
  $region16: #{transformer_classifier_forward.13} parent=0 // pred_region
    _
  $region17: #{transformer_classifier_forward.13} parent=0 // pred_fallthru
    _
  // Predicated region
  $region18: #{transformer_classifier_forward.13} parent=0 // pred_check
    _
  $region19: #{transformer_classifier_forward.13} parent=0 // pred_check_branch
    %20 = sbr.rel (0) target = $region21
  $region20: #{transformer_classifier_forward.13} parent=0 // pred_region
    _
  $region21: #{transformer_classifier_forward.13} parent=0 // pred_fallthru
    _
  // Predicated region
  $region22: #{transformer_classifier_forward.13} parent=0 // pred_check
    _
  $region23: #{transformer_classifier_forward.13} parent=0 // pred_check_branch
    %22 = sbr.rel (0) target = $region25
  $region24: #{transformer_classifier_forward.13} parent=0 // pred_region
    _
  $region25: #{transformer_classifier_forward.13} parent=0 // pred_fallthru
    _
  %v24 = vld [vmem:[%s0] sm:$0xf]
  %v25 = vld [vmem:[%s0 + $0x4] sm:$0xf]
  %v26 = vld [vmem:[%s1] sm:$0xf]
  %v27 = vld [vmem:[%s1 + $0x4] sm:$0xf]
  %v28 = vld [vmem:[%s1 + $0x8] sm:$0xf]
  %v29 = vld [vmem:[%s1 + $0xc] sm:$0xf]
  %v30 = vld [vmem:[%s2] sm:$0x1]
  %v32 = vlaneseq
  %v33 = vshrl.u32 %v32, 7
  %v34 = vsub.s32 0, %v33
  %v35 = vrot.slane %v30, %v34
  %v39 = vunpack.c.l.b16 %v24
  %v40 = vunpack.c.l.b16 %v25
  %v41 = vpack.c.b16 %v40, %v39
  %v46 = vunpack.c.l.b16 %v26
  %v47 = vunpack.c.l.b16 %v27
  %v48 = vunpack.c.l.b16 %v28
  %v49 = vunpack.c.l.b16 %v29
  %v50 = vpack.c.b16 %v47, %v46
  %v51 = vpack.c.b16 %v49, %v48
  %vm54 = vcmask 261120
  %v56 = vsel %vm54, %v41, 0
  %58 = vmatprep.subr.bf16.mxu0 0
  %59 = vmatpush1.bf16.msra.mxu0 %v50
  %60 = vmatprep.subr.bf16.mxu0 0
  %61 = vmatpush1.bf16.msra.mxu0 %v51
  %62 = vmatprep.subr.bf16.mxu0 0
  %63 = vmatpush1.bf16.msra.mxu0 0
  %64 = vmatprep.subr.bf16.mxu0 0
  %65 = vmatpush1.bf16.msra.mxu0 0
  %66 = vmatprep.subr.bf16.mxu0 0
  %67 = vmatpush1.bf16.msra.mxu0 0
  %68 = vmatprep.subr.bf16.mxu0 0
  %69 = vmatpush1.bf16.msra.mxu0 0
  %70 = vmatprep.subr.bf16.mxu0 0
  %71 = vmatpush1.bf16.msra.mxu0 0
  %72 = vmatprep.subr.bf16.mxu0 0
  %73 = vmatpush1.bf16.msra.mxu0 0
  %74 = vmatprep.subr.bf16.mxu0 0
  %75 = vmatpush1.bf16.msra.mxu0 0
  %76 = vmatprep.subr.bf16.mxu0 0
  %77 = vmatpush1.bf16.msra.mxu0 0
  %78 = vmatprep.subr.bf16.mxu0 0
  %79 = vmatpush1.bf16.msra.mxu0 0
  %80 = vmatprep.subr.bf16.mxu0 0
  %81 = vmatpush1.bf16.msra.mxu0 0
  %82 = vmatprep.subr.bf16.mxu0 0
  %83 = vmatpush1.bf16.msra.mxu0 0
  %84 = vmatprep.subr.bf16.mxu0 0
  %85 = vmatpush1.bf16.msra.mxu0 0
  %86 = vmatprep.subr.bf16.mxu0 0
  %87 = vmatpush1.bf16.msra.mxu0 0
  %88 = vmatprep.subr.bf16.mxu0 0
  %89 = vmatpush1.bf16.msra.mxu0 0
  %90 = vmatprep.mubr.bf16.mxu0 0
  %91 = vmatmul.mubr.bf16.gmra.mrb[0].mxu0 %v56
  %v92 = vpop.f32.mrb[0].mxu0
  %v93 = vadd.f32 %v35, %v92
  %v94 = vpop.f32.mrb[0].mxu0
  %v95 = vpop.f32.mrb[0].mxu0
  %v96 = vadd.f32 %v35, %v95
  %v97 = vpop.f32.mrb[0].mxu0
  %98 = vdwg.mxu0
  %v99 = vld [vmem:[%s3] sm:$0xf]
  %v100 = vld [vmem:[%s3 + $0x4] sm:$0xf]
  %v101 = vunpack.c.l.bf16 %v99
  %v102 = vunpack.c.l.bf16 %v100
  %v103 = vadd.f32 %v93, %v101
  %v104 = vadd.f32 %v96, %v102
  %v105 = vsel %vm54, %v103, 0.0
  %106 = vadd.xlane.f32.xlu0 %v105
  %v107 = vpop.xlane.xlu0 %106
  %v108 = vsel %vm54, %v104, 0.0
  %109 = vadd.xlane.f32.xlu0 %v108
  %v110 = vpop.xlane.xlu0 %109
  %v111 = vrcp.pop 32.0
  %v112 = vmul.f32 %v107, %v111
  %v113 = vmul.f32 %v110, %v111
  %v114 = vsub.f32 %v103, %v112
  %v115 = vsub.f32 %v104, %v113
  %v116 = vmul.f32 %v114, %v114
  %v117 = vmul.f32 %v115, %v115
  %v118 = vsel %vm54, %v116, 0.0
  %119 = vadd.xlane.f32.xlu0 %v118
  %v120 = vpop.xlane.xlu0 %119
  %v121 = vsel %vm54, %v117, 0.0
  %122 = vadd.xlane.f32.xlu0 %v121
  %v123 = vpop.xlane.xlu0 %122
  %v124 = vmul.f32 %v120, %v111
  %v125 = vmul.f32 %v123, %v111
  %v126 = vadd.f32 %v124, 1e-12
  %v127 = vadd.f32 %v125, 1e-12
  %v128 = vrsqrt.pop %v126
  %v129 = vrsqrt.pop %v127
  %v130 = vmul.f32 %v114, %v128
  %v131 = vmul.f32 %v115, %v129
  %v132 = vld [vmem:[%s4] sm:$0x1]
  %v134 = vlaneseq
  %v135 = vshrl.u32 %v134, 7
  %v136 = vsub.s32 0, %v135
  %v137 = vrot.slane %v132, %v136
  %v139 = vmul.f32 %v130, %v137
  %v140 = vmul.f32 %v131, %v137
  %v141 = vld [vmem:[%s5] sm:$0x1]
  %v143 = vlaneseq
  %v144 = vshrl.u32 %v143, 7
  %v145 = vsub.s32 0, %v144
  %v146 = vrot.slane %v141, %v145
  %v148 = vadd.f32 %v139, %v146
  %v149 = vadd.f32 %v140, %v146
  %v150 = vpack.c.bf16 %v149, %v148
  %v152 = vunpack.c.l.b16 %v150
  %v153 = vunpack.c.h.b16 %v150
  %v154 = vpack.c.b16 %v152, %v152
  %v155 = vpack.c.b16 %v153, %v153
  %vm158 = vcmask 257024
  %159 = vst.msk [vmem:[%s6] sm:$0xf] %vm158, %v154
  %160 = vst.msk [vmem:[%s6 + $0x4] sm:$0xf] %vm158, %v155
  // Predicated region
  $region26: #{transformer_classifier_forward.13} parent=0 // pred_check
    _
  $region27: #{transformer_classifier_forward.13} parent=0 // pred_check_branch
    %162 = sbr.rel (0) target = $region29
  $region28: #{transformer_classifier_forward.13} parent=0 // pred_region
    _
  $region29: #{transformer_classifier_forward.13} parent=0 // pred_fallthru
    _
  // Predicated region
  $region30: #{transformer_classifier_forward.13} parent=0 // pred_check
    _
  $region31: #{transformer_classifier_forward.13} parent=0 // pred_check_branch
    %164 = sbr.rel (0) target = $region33
  $region32: #{transformer_classifier_forward.13} parent=0 // pred_region
    _
  $region33: #{transformer_classifier_forward.13} parent=0 // pred_fallthru
    _

// kernel: transformer_classifier_forward.12
$region0: #{transformer_classifier_forward.12}
  #allocation0 [shape = 'u32[]', space=smem, size = 0x4, offset = 0x4, fixed_abs, tag = 'smem constant byte address 0x4 - core index']
  #allocation1 [shape = 'u32[144,128]{1,0:T(1,128)}', space=vmem, size = 0x12000, scoped, tag = 'internal scratch']
  %s0 = inlined_call_operand.vmem [shape: bf16[2,8,96], index: 0, kind: input, shape index: {}]
  %s1 = inlined_call_operand.vmem [shape: bf16[2,8,32], index: 1, kind: output, shape index: {}]
  %s2 = sld [smem:[#allocation0]]
  $region37: #{transformer_classifier_forward.12} parent=0
    _
  %s4 = ssub.s32 1, %s2
  %s5 = scalar_select 0, %s4, %s2
  loop: start=0, step=1, limit=4
  $region2: #{transformer_classifier_forward.12} parent=0 // loop_pre_header
    _
  $region3: #{transformer_classifier_forward.12} parent=0 // loop_header
    %s7 = sphi 0, %s11
    %p8 = scmp.ge.s32.totalorder %s7, 4
    %s17 = sphi 0, %s19
    %s20 = sphi 0, %s17
    %s21 = sphi 0, %s20
    %s37 = sphi 0, %s21
    %s43 = sphi 0, %s45
    %s46 = sphi 0, %s43
    %s47 = sphi 0, %s46
    %s63 = sphi 0, %s47
  $region4: #{transformer_classifier_forward.12} parent=0 // loop_header_branch
    %10 = sbr.rel (%p8) target = $region8
  $region5: #{transformer_classifier_forward.12} parent=0 // loop_body
    %s12 = ssub.s32 %s7, 1
    %s13 = ssub.s32 %s7, 2
    %s14 = sadd.s32 %s7, 1
    %s15 = ssub.s32 %s7, %s14
    %p16 = scmp.eq.s32.totalorder %s15, 0
    %s18 = sadd.s32 %s17, 1
    %s19 = scalar_select %p16, %s17, %s18
    %p22 = pneg %p16
    %p23 = scmp.eq.s32.totalorder %s7, 1
    %p24 = por %p22, %p23
    %p25 = scmp.ne.s32.totalorder %s17, %s20
    %p26 = scmp.eq.s32.totalorder %s7, 0
    %p27 = por %p25, %p26
    %p28 = scmp.ne.s32.totalorder %s17, %s20
    %p29 = scmp.eq.s32.totalorder %s12, 1
    %p30 = por %p28, %p29
    %p31 = scmp.ne.s32.totalorder %s20, %s21
    %p32 = scmp.eq.s32.totalorder %s12, 0
    %p33 = por %p31, %p32
    %p34 = scmp.ne.s32.totalorder %s20, %s21
    %p35 = scmp.eq.s32.totalorder %s13, 1
    %p36 = por %p34, %p35
    %p38 = scmp.ne.s32.totalorder %s21, %s37
    %p39 = scmp.eq.s32.totalorder %s13, 0
    %p40 = por %p38, %p39
    %s41 = ssub.s32 %s7, %s14
    %p42 = scmp.eq.s32.totalorder %s41, 0
    %s44 = sadd.s32 %s43, 1
    %s45 = scalar_select %p42, %s43, %s44
    %p48 = pneg %p42
    %p49 = scmp.eq.s32.totalorder %s7, 1
    %p50 = por %p48, %p49
    %p51 = scmp.ne.s32.totalorder %s43, %s46
    %p52 = scmp.eq.s32.totalorder %s7, 0
    %p53 = por %p51, %p52
    %p54 = scmp.ne.s32.totalorder %s43, %s46
    %p55 = scmp.eq.s32.totalorder %s12, 1
    %p56 = por %p54, %p55
    %p57 = scmp.ne.s32.totalorder %s46, %s47
    %p58 = scmp.eq.s32.totalorder %s12, 0
    %p59 = por %p57, %p58
    %p60 = scmp.ne.s32.totalorder %s46, %s47
    %p61 = scmp.eq.s32.totalorder %s13, 1
    %p62 = por %p60, %p61
    %p64 = scmp.ne.s32.totalorder %s47, %s63
    %p65 = scmp.eq.s32.totalorder %s13, 0
    %p66 = por %p64, %p65
    %p67 = scmp.le.s32.totalorder 1, %s7
    %p68 = scmp.lt.s32.totalorder %s7, 3
    %p69 = pnand %p67, %p68
    %p70 = pneg %p69
    // Predicated region
    $region9: #{transformer_classifier_forward.12} parent=5 // pred_check
      _
    $region10: #{transformer_classifier_forward.12} parent=5 // pred_check_branch
      %72 = sbr.rel (%p69) target = $region12
    $region11: #{transformer_classifier_forward.12} parent=5 // pred_region
      %s73 = ssub.s32 %s7, 1
    $region12: #{transformer_classifier_forward.12} parent=5 // pred_fallthru
      _
    %p74 = scmp.lt.s32.totalorder %s7, 2
    // Predicated region
    $region13: #{transformer_classifier_forward.12} parent=5 // pred_check
      %p75 = pneg %p74
    $region14: #{transformer_classifier_forward.12} parent=5 // pred_check_branch
      %77 = sbr.rel (%p75) target = $region16
    $region15: #{transformer_classifier_forward.12} parent=5 // pred_region
      // Predicated region
      $region17: #{transformer_classifier_forward.12} parent=15 // pred_check
        %p78 = pneg %p27
      $region18: #{transformer_classifier_forward.12} parent=15 // pred_check_branch
        %80 = sbr.rel (%p78) target = $region20
      $region19: #{transformer_classifier_forward.12} parent=15 // pred_region
        %p81 = scmp.lt.s32.totalorder %s7, 1
        %s82 = scalar_select %p81, %s7, 1
        %s83 = smul.addr %s82, 4
        %s84 = scalar_lea.vmem %s0, %s83
      $region20: #{transformer_classifier_forward.12} parent=15 // pred_fallthru
        _
    $region16: #{transformer_classifier_forward.12} parent=5 // pred_fallthru
      _
    %p85 = scmp.le.s32.totalorder 1, %s7
    %p86 = scmp.lt.s32.totalorder %s7, 3
    %p87 = pnand %p85, %p86
    %p88 = pneg %p87
    // Predicated region
    $region21: #{transformer_classifier_forward.12} parent=5 // pred_check
      _
    $region22: #{transformer_classifier_forward.12} parent=5 // pred_check_branch
      %90 = sbr.rel (%p87) target = $region24
    $region23: #{transformer_classifier_forward.12} parent=5 // pred_region
      %s91 = ssub.s32 %s7, 1
      %p92 = scmp.lt.s32.totalorder %s12, 1
      %s93 = scalar_select %p92, %s12, 1
      %s94 = smul.addr %s93, 4
      %s95 = scalar_lea.vmem %s0, %s94
      %p96 = pneg %p33
      %p97 = pneg %p30
      %p98 = pneg %p59
      %p99 = pneg %p56
      %p100 = scmp.lt.s32.totalorder %s12, 1
      %s101 = scalar_select %p100, %s12, 1
      %s102 = smul.addr %s101, 4
      %s103 = scalar_lea.vmem %s1, %s102
      %p104 = scmp.lt.s32.totalorder %s12, 1
      %s105 = scalar_select %p104, %s12, 1
      %s106 = smul.addr %s105, 4
      %s107 = scalar_lea.vmem %s0, %s106
      %p108 = scmp.lt.s32.totalorder %s12, 1
      %s109 = scalar_select %p108, %s12, 1
      %s110 = smul.addr %s109, 4
      %s111 = scalar_lea.vmem %s1, %s110
      %v113 = vld [vmem:[%s107] sm:$0xf]
      %v114 = vunpack.c.l.bf16 %v113
      %v115 = vmul.f32 %v114, 0.25
      %v116 = vpack.c.bf16 %v115, %v115
      %v118 = vunpack.c.l.b16 %v113
      %v119 = vpack.c.b16 %v118, %v118
      %120 = vrot.lane.b32.xlu0 %v119, 96
      %v121 = vpop.permute.xlu0 %120
      %vm122 = vcmask 130048
      %v124 = vsel %vm122, %v116, 0
      %v127 = vsel %vm122, %v121, 0
      %129 = vmatprep.subr.bf16.mxu0 0
      %130 = vmatpush1.bf16.xpose.msra.mxu0 %v127
      %131 = vmatprep.subr.bf16.mxu0 0
      %132 = vmatpush1.bf16.xpose.msra.mxu0 0
      %133 = vmatprep.subr.bf16.mxu0 0
      %134 = vmatpush1.bf16.xpose.msra.mxu0 0
      %135 = vmatprep.subr.bf16.mxu0 0
      %136 = vmatpush1.bf16.xpose.msra.mxu0 0
      %137 = vmatprep.subr.bf16.mxu0 0
      %138 = vmatpush1.bf16.xpose.msra.mxu0 0
      %139 = vmatprep.subr.bf16.mxu0 0
      %140 = vmatpush1.bf16.xpose.msra.mxu0 0
      %141 = vmatprep.subr.bf16.mxu0 0
      %142 = vmatpush1.bf16.xpose.msra.mxu0 0
      %143 = vmatprep.subr.bf16.mxu0 0
      %144 = vmatpush1.bf16.xpose.msra.mxu0 0
      %145 = vmatprep.subr.bf16.mxu0 0
      %146 = vmatpush1.bf16.xpose.msra.mxu0 0
      %147 = vmatprep.subr.bf16.mxu0 0
      %148 = vmatpush1.bf16.xpose.msra.mxu0 0
      %149 = vmatprep.subr.bf16.mxu0 0
      %150 = vmatpush1.bf16.xpose.msra.mxu0 0
      %151 = vmatprep.subr.bf16.mxu0 0
      %152 = vmatpush1.bf16.xpose.msra.mxu0 0
      %153 = vmatprep.subr.bf16.mxu0 0
      %154 = vmatpush1.bf16.xpose.msra.mxu0 0
      %155 = vmatprep.subr.bf16.mxu0 0
      %156 = vmatpush1.bf16.xpose.msra.mxu0 0
      %157 = vmatprep.subr.bf16.mxu0 0
      %158 = vmatpush1.bf16.xpose.msra.mxu0 0
      %159 = vmatprep.subr.bf16.mxu0 0
      %160 = vmatpush1.bf16.xpose.msra.mxu0 0
      %161 = vmatprep.mubr.bf16.mxu0 0
      %162 = vmatmul.mubr.bf16.gmra.mrb[0].mxu0 %v124
      %v163 = vpop.f32.mrb[0].mxu0
      %v164 = vadd.f32 0.0, %v163
      %v165 = vpop.f32.mrb[0].mxu0
      %v166 = vpop.f32.mrb[0].mxu0
      %v167 = vpop.f32.mrb[0].mxu0
      %168 = vdwg.mxu0
      %vm169 = vcmask 64512
      %v170 = vsel %vm169, %v164, -inf
      %171 = vmax.xlane.f32.xlu0 %v170
      %v172 = vpop.xlane.xlu0 %171
      %v173 = vsub.f32 %v164, %v172
      %v174 = vmul.f32 %v173, 1.442695
      %v175 = vpow.pop %v174
      %v176 = vsel %vm169, %v175, 0.0
      %177 = vadd.xlane.f32.xlu0 %v176
      %v178 = vpop.xlane.xlu0 %177
      %v179 = vrcp.pop %v178
      %v180 = vmul.f32 %v175, %v179
      %v181 = vpack.c.bf16 %v180, %v180
      %182 = vrot.lane.b32.xlu0 %v119, 64
      %v183 = vpop.permute.xlu0 %182
      %v185 = vsel %vm169, %v181, 0
      %vm187 = vcmask 1043456
      %v189 = vsel %vm187, %v183, 0
      %191 = vmatprep.subr.bf16.mxu0 0
      %192 = vmatpush1.bf16.msra.mxu0 %v189
      %193 = vmatprep.subr.bf16.mxu0 0
      %194 = vmatpush1.bf16.msra.mxu0 0
      %195 = vmatprep.subr.bf16.mxu0 0
      %196 = vmatpush1.bf16.msra.mxu0 0
      %197 = vmatprep.subr.bf16.mxu0 0
      %198 = vmatpush1.bf16.msra.mxu0 0
      %199 = vmatprep.subr.bf16.mxu0 0
      %200 = vmatpush1.bf16.msra.mxu0 0
      %201 = vmatprep.subr.bf16.mxu0 0
      %202 = vmatpush1.bf16.msra.mxu0 0
      %203 = vmatprep.subr.bf16.mxu0 0
      %204 = vmatpush1.bf16.msra.mxu0 0
      %205 = vmatprep.subr.bf16.mxu0 0
      %206 = vmatpush1.bf16.msra.mxu0 0
      %207 = vmatprep.subr.bf16.mxu0 0
      %208 = vmatpush1.bf16.msra.mxu0 0
      %209 = vmatprep.subr.bf16.mxu0 0
      %210 = vmatpush1.bf16.msra.mxu0 0
      %211 = vmatprep.subr.bf16.mxu0 0
      %212 = vmatpush1.bf16.msra.mxu0 0
      %213 = vmatprep.subr.bf16.mxu0 0
      %214 = vmatpush1.bf16.msra.mxu0 0
      %215 = vmatprep.subr.bf16.mxu0 0
      %216 = vmatpush1.bf16.msra.mxu0 0
      %217 = vmatprep.subr.bf16.mxu0 0
      %218 = vmatpush1.bf16.msra.mxu0 0
      %219 = vmatprep.subr.bf16.mxu0 0
      %220 = vmatpush1.bf16.msra.mxu0 0
      %221 = vmatprep.subr.bf16.mxu0 0
      %222 = vmatpush1.bf16.msra.mxu0 0
      %223 = vmatprep.mubr.bf16.mxu0 0
      %224 = vmatmul.mubr.bf16.gmra.mrb[0].mxu0 %v185
      %v225 = vpop.f32.mrb[0].mxu0
      %v226 = vadd.f32 0.0, %v225
      %v227 = vpop.f32.mrb[0].mxu0
      %v228 = vpop.f32.mrb[0].mxu0
      %v229 = vpop.f32.mrb[0].mxu0
      %230 = vdwg.mxu0
      %v231 = vpack.c.bf16 %v226, %v226
      %vm232 = vcmask 125952
      %233 = vst.msk [vmem:[%s111] sm:$0xf] %vm232, %v231
      %235 = vrot.lane.b32.xlu0 %v116, 112
      %v236 = vpop.permute.xlu0 %235
      %237 = vrot.lane.b32.xlu0 %v119, 80
      %v238 = vpop.permute.xlu0 %237
      %v240 = vsel %vm122, %v236, 0
      %v243 = vsel %vm122, %v238, 0
      %245 = vmatprep.subr.bf16.mxu0 0
      %246 = vmatpush1.bf16.xpose.msra.mxu0 %v243
      %247 = vmatprep.subr.bf16.mxu0 0
      %248 = vmatpush1.bf16.xpose.msra.mxu0 0
      %249 = vmatprep.subr.bf16.mxu0 0
      %250 = vmatpush1.bf16.xpose.msra.mxu0 0
      %251 = vmatprep.subr.bf16.mxu0 0
      %252 = vmatpush1.bf16.xpose.msra.mxu0 0
      %253 = vmatprep.subr.bf16.mxu0 0
      %254 = vmatpush1.bf16.xpose.msra.mxu0 0
      %255 = vmatprep.subr.bf16.mxu0 0
      %256 = vmatpush1.bf16.xpose.msra.mxu0 0
      %257 = vmatprep.subr.bf16.mxu0 0
      %258 = vmatpush1.bf16.xpose.msra.mxu0 0
      %259 = vmatprep.subr.bf16.mxu0 0
      %260 = vmatpush1.bf16.xpose.msra.mxu0 0
      %261 = vmatprep.subr.bf16.mxu0 0
      %262 = vmatpush1.bf16.xpose.msra.mxu0 0
      %263 = vmatprep.subr.bf16.mxu0 0
      %264 = vmatpush1.bf16.xpose.msra.mxu0 0
      %265 = vmatprep.subr.bf16.mxu0 0
      %266 = vmatpush1.bf16.xpose.msra.mxu0 0
      %267 = vmatprep.subr.bf16.mxu0 0
      %268 = vmatpush1.bf16.xpose.msra.mxu0 0
      %269 = vmatprep.subr.bf16.mxu0 0
      %270 = vmatpush1.bf16.xpose.msra.mxu0 0
      %271 = vmatprep.subr.bf16.mxu0 0
      %272 = vmatpush1.bf16.xpose.msra.mxu0 0
      %273 = vmatprep.subr.bf16.mxu0 0
      %274 = vmatpush1.bf16.xpose.msra.mxu0 0
      %275 = vmatprep.subr.bf16.mxu0 0
      %276 = vmatpush1.bf16.xpose.msra.mxu0 0
      %277 = vmatprep.mubr.bf16.mxu0 0
      %278 = vmatmul.mubr.bf16.gmra.mrb[0].mxu0 %v240
      %v279 = vpop.f32.mrb[0].mxu0
      %v280 = vadd.f32 0.0, %v279
      %v281 = vpop.f32.mrb[0].mxu0
      %v282 = vpop.f32.mrb[0].mxu0
      %v283 = vpop.f32.mrb[0].mxu0
      %284 = vdwg.mxu0
      %v285 = vsel %vm169, %v280, -inf
      %286 = vmax.xlane.f32.xlu0 %v285
      %v287 = vpop.xlane.xlu0 %286
      %v288 = vsub.f32 %v280, %v287
      %v289 = vmul.f32 %v288, 1.442695
      %v290 = vpow.pop %v289
      %v291 = vsel %vm169, %v290, 0.0
      %292 = vadd.xlane.f32.xlu0 %v291
      %v293 = vpop.xlane.xlu0 %292
      %v294 = vrcp.pop %v293
      %v295 = vmul.f32 %v290, %v294
      %v296 = vpack.c.bf16 %v295, %v295
      %297 = vrot.lane.b32.xlu0 %v119, 48
      %v298 = vpop.permute.xlu0 %297
      %v300 = vsel %vm169, %v296, 0
      %v303 = vsel %vm187, %v298, 0
      %305 = vmatprep.subr.bf16.mxu0 0
      %306 = vmatpush1.bf16.msra.mxu0 %v303
      %307 = vmatprep.subr.bf16.mxu0 0
      %308 = vmatpush1.bf16.msra.mxu0 0
      %309 = vmatprep.subr.bf16.mxu0 0
      %310 = vmatpush1.bf16.msra.mxu0 0
      %311 = vmatprep.subr.bf16.mxu0 0
      %312 = vmatpush1.bf16.msra.mxu0 0
      %313 = vmatprep.subr.bf16.mxu0 0
      %314 = vmatpush1.bf16.msra.mxu0 0
      %315 = vmatprep.subr.bf16.mxu0 0
      %316 = vmatpush1.bf16.msra.mxu0 0
      %317 = vmatprep.subr.bf16.mxu0 0
      %318 = vmatpush1.bf16.msra.mxu0 0
      %319 = vmatprep.subr.bf16.mxu0 0
      %320 = vmatpush1.bf16.msra.mxu0 0
      %321 = vmatprep.subr.bf16.mxu0 0
      %322 = vmatpush1.bf16.msra.mxu0 0
      %323 = vmatprep.subr.bf16.mxu0 0
      %324 = vmatpush1.bf16.msra.mxu0 0
      %325 = vmatprep.subr.bf16.mxu0 0
      %326 = vmatpush1.bf16.msra.mxu0 0
      %327 = vmatprep.subr.bf16.mxu0 0
      %328 = vmatpush1.bf16.msra.mxu0 0
      %329 = vmatprep.subr.bf16.mxu0 0
      %330 = vmatpush1.bf16.msra.mxu0 0
      %331 = vmatprep.subr.bf16.mxu0 0
      %332 = vmatpush1.bf16.msra.mxu0 0
      %333 = vmatprep.subr.bf16.mxu0 0
      %334 = vmatpush1.bf16.msra.mxu0 0
      %335 = vmatprep.subr.bf16.mxu0 0
      %336 = vmatpush1.bf16.msra.mxu0 0
      %337 = vmatprep.mubr.bf16.mxu0 0
      %338 = vmatmul.mubr.bf16.gmra.mrb[0].mxu0 %v300
      %v339 = vpop.f32.mrb[0].mxu0
      %v340 = vadd.f32 0.0, %v339
      %v341 = vpop.f32.mrb[0].mxu0
      %v342 = vpop.f32.mrb[0].mxu0
      %v343 = vpop.f32.mrb[0].mxu0
      %344 = vdwg.mxu0
      %v345 = vpack.c.bf16 %v340, %v340
      %v347 = vunpack.c.l.b16 %v345
      %v348 = vpack.c.b16 %v347, %v347
      %349 = vrot.lane.b32.xlu0 %v348, 16
      %v350 = vpop.permute.xlu0 %349
      %vm352 = vcmask 257152
      %353 = vst.msk [vmem:[%s111] sm:$0xf] %vm352, %v350
      %p354 = scmp.lt.s32.totalorder %s12, 1
      %s355 = scalar_select %p354, %s12, 1
      %s356 = smul.addr %s355, 4
      %s357 = scalar_lea.vmem %s1, %s356
      // Predicated region
      $region25: #{transformer_classifier_forward.12} parent=23 // pred_check
        %p358 = pneg %p56
      $region26: #{transformer_classifier_forward.12} parent=23 // pred_check_branch
        %360 = sbr.rel (%p358) target = $region28
      $region27: #{transformer_classifier_forward.12} parent=23 // pred_region
        _
      $region28: #{transformer_classifier_forward.12} parent=23 // pred_fallthru
        _
    $region24: #{transformer_classifier_forward.12} parent=5 // pred_fallthru
      _
    %p361 = scmp.le.s32.totalorder 2, %s7
    // Predicated region
    $region29: #{transformer_classifier_forward.12} parent=5 // pred_check
      %p362 = pneg %p361
    $region30: #{transformer_classifier_forward.12} parent=5 // pred_check_branch
      %364 = sbr.rel (%p362) target = $region32
    $region31: #{transformer_classifier_forward.12} parent=5 // pred_region
      %s365 = ssub.s32 %s7, 2
      // Predicated region
      $region33: #{transformer_classifier_forward.12} parent=31 // pred_check
        %p366 = pneg %p62
      $region34: #{transformer_classifier_forward.12} parent=31 // pred_check_branch
        %368 = sbr.rel (%p366) target = $region36
      $region35: #{transformer_classifier_forward.12} parent=31 // pred_region
        %p369 = scmp.lt.s32.totalorder %s13, 1
        %s370 = scalar_select %p369, %s13, 1
        %s371 = smul.addr %s370, 4
        %s372 = scalar_lea.vmem %s1, %s371
      $region36: #{transformer_classifier_forward.12} parent=31 // pred_fallthru
        _
    $region32: #{transformer_classifier_forward.12} parent=5 // pred_fallthru
      _
  $region6: #{transformer_classifier_forward.12} parent=0 // loop_footer
    %s11 = sadd.s32 1, %s7
  $region7: #{transformer_classifier_forward.12} parent=0 // loop_footer_branch
    %6 = sbr.rel target = $region3
  $region8: #{transformer_classifier_forward.12} parent=0 // loop_exit
    _

// kernel: transformer_classifier_forward.19
$region0: #{transformer_classifier_forward.19}
  #allocation0 [shape = 'u32[]', space=smem, size = 0x4, offset = 0x4, fixed_abs, tag = 'smem constant byte address 0x4 - core index']
  #allocation1 [shape = 'u32[144,128]{1,0:T(1,128)}', space=vmem, size = 0x12000, scoped, tag = 'internal scratch']
  %s0 = inlined_call_operand.vmem [shape: bf16[2,32], index: 0, kind: input, shape index: {}]
  %s1 = inlined_call_operand.vmem [shape: bf16[32,32], index: 1, kind: input, shape index: {}]
  %s2 = inlined_call_operand.vmem [shape: f32[1,32], index: 2, kind: input, shape index: {}]
  %s3 = inlined_call_operand.vmem [shape: bf16[32,3], index: 3, kind: input, shape index: {}]
  %s4 = inlined_call_operand.vmem [shape: f32[1,3], index: 4, kind: input, shape index: {}]
  %s5 = inlined_call_operand.hbm [shape: f32[2,3], index: 5, kind: output, shape index: {}]
  %s6 = sld [smem:[#allocation0]]
  $region30: #{transformer_classifier_forward.19} parent=0
    _
  %s8 = ssub.s32 1, %s6
  %s9 = scalar_select 0, %s8, %s6
  $region1: #{transformer_classifier_forward.19} parent=0
    #allocation2 [shape = 'u8[1024]{0}', space=vmem, size = 0x400, scoped, tag = 'output window, operand 0, single buffered']
    #allocation3 [shape = 's32[1]{0}', space=sflag, size = 0x4, scoped, tag = 'scoped memory for transformer_classifier_forward.19']
    %10 = vsyncpa [#allocation3], 0
    // Predicated region
    $region2: #{transformer_classifier_forward.19} parent=1 // pred_check
      _
    $region3: #{transformer_classifier_forward.19} parent=1 // pred_check_branch
      %12 = sbr.rel (0) target = $region5
    $region4: #{transformer_classifier_forward.19} parent=1 // pred_region
      _
    $region5: #{transformer_classifier_forward.19} parent=1 // pred_fallthru
      _
    // Predicated region
    $region6: #{transformer_classifier_forward.19} parent=1 // pred_check
      _
    $region7: #{transformer_classifier_forward.19} parent=1 // pred_check_branch
      %14 = sbr.rel (0) target = $region9
    $region8: #{transformer_classifier_forward.19} parent=1 // pred_region
      _
    $region9: #{transformer_classifier_forward.19} parent=1 // pred_fallthru
      _
    // Predicated region
    $region10: #{transformer_classifier_forward.19} parent=1 // pred_check
      _
    $region11: #{transformer_classifier_forward.19} parent=1 // pred_check_branch
      %16 = sbr.rel (0) target = $region13
    $region12: #{transformer_classifier_forward.19} parent=1 // pred_region
      _
    $region13: #{transformer_classifier_forward.19} parent=1 // pred_fallthru
      _
    // Predicated region
    $region14: #{transformer_classifier_forward.19} parent=1 // pred_check
      _
    $region15: #{transformer_classifier_forward.19} parent=1 // pred_check_branch
      %18 = sbr.rel (0) target = $region17
    $region16: #{transformer_classifier_forward.19} parent=1 // pred_region
      _
    $region17: #{transformer_classifier_forward.19} parent=1 // pred_fallthru
      _
    // Predicated region
    $region18: #{transformer_classifier_forward.19} parent=1 // pred_check
      _
    $region19: #{transformer_classifier_forward.19} parent=1 // pred_check_branch
      %20 = sbr.rel (0) target = $region21
    $region20: #{transformer_classifier_forward.19} parent=1 // pred_region
      _
    $region21: #{transformer_classifier_forward.19} parent=1 // pred_fallthru
      _
    %v22 = vld [vmem:[%s0] sm:$0x1]
    %v23 = vld [vmem:[%s1] sm:$0xf]
    %v24 = vld [vmem:[%s1 + $0x4] sm:$0xf]
    %v25 = vld [vmem:[%s1 + $0x8] sm:$0xf]
    %v26 = vld [vmem:[%s1 + $0xc] sm:$0xf]
    %v27 = vld [vmem:[%s2] sm:$0x1]
    %v29 = vlaneseq
    %v30 = vshrl.u32 %v29, 7
    %v31 = vsub.s32 0, %v30
    %v32 = vrot.slane %v27, %v31
    %v38 = vunpack.c.l.b16 %v23
    %v39 = vunpack.c.l.b16 %v24
    %v40 = vunpack.c.l.b16 %v25
    %v41 = vunpack.c.l.b16 %v26
    %v42 = vpack.c.b16 %v39, %v38
    %v43 = vpack.c.b16 %v41, %v40
    %vm46 = vcmask 261120
    %v48 = vsel %vm46, %v22, 0
    %50 = vmatprep.subr.bf16.mxu0 0
    %51 = vmatpush1.bf16.msra.mxu0 %v42
    %52 = vmatprep.subr.bf16.mxu0 0
    %53 = vmatpush1.bf16.msra.mxu0 %v43
    %54 = vmatprep.subr.bf16.mxu0 0
    %55 = vmatpush1.bf16.msra.mxu0 0
    %56 = vmatprep.subr.bf16.mxu0 0
    %57 = vmatpush1.bf16.msra.mxu0 0
    %58 = vmatprep.subr.bf16.mxu0 0
    %59 = vmatpush1.bf16.msra.mxu0 0
    %60 = vmatprep.subr.bf16.mxu0 0
    %61 = vmatpush1.bf16.msra.mxu0 0
    %62 = vmatprep.subr.bf16.mxu0 0
    %63 = vmatpush1.bf16.msra.mxu0 0
    %64 = vmatprep.subr.bf16.mxu0 0
    %65 = vmatpush1.bf16.msra.mxu0 0
    %66 = vmatprep.subr.bf16.mxu0 0
    %67 = vmatpush1.bf16.msra.mxu0 0
    %68 = vmatprep.subr.bf16.mxu0 0
    %69 = vmatpush1.bf16.msra.mxu0 0
    %70 = vmatprep.subr.bf16.mxu0 0
    %71 = vmatpush1.bf16.msra.mxu0 0
    %72 = vmatprep.subr.bf16.mxu0 0
    %73 = vmatpush1.bf16.msra.mxu0 0
    %74 = vmatprep.subr.bf16.mxu0 0
    %75 = vmatpush1.bf16.msra.mxu0 0
    %76 = vmatprep.subr.bf16.mxu0 0
    %77 = vmatpush1.bf16.msra.mxu0 0
    %78 = vmatprep.subr.bf16.mxu0 0
    %79 = vmatpush1.bf16.msra.mxu0 0
    %80 = vmatprep.subr.bf16.mxu0 0
    %81 = vmatpush1.bf16.msra.mxu0 0
    %82 = vmatprep.mubr.bf16.mxu0 0
    %83 = vmatmul.mubr.bf16.gmra.mrb[0].mxu0 %v48
    %v84 = vpop.f32.mrb[0].mxu0
    %v85 = vadd.f32 %v32, %v84
    %v86 = vpop.f32.mrb[0].mxu0
    %v87 = vpop.f32.mrb[0].mxu0
    %v88 = vpop.f32.mrb[0].mxu0
    %89 = vdwg.mxu0
    %v90 = vtanh.pop %v85
    %v91 = vpack.c.bf16 %v90, %v90
    %v92 = vld [vmem:[%s3] sm:$0xf]
    %v93 = vld [vmem:[%s3 + $0x4] sm:$0xf]
    %v94 = vld [vmem:[%s3 + $0x8] sm:$0xf]
    %v95 = vld [vmem:[%s3 + $0xc] sm:$0xf]
    %v96 = vld [vmem:[%s4] sm:$0x1]
    %v98 = vlaneseq
    %v99 = vshrl.u32 %v98, 7
    %v100 = vsub.s32 0, %v99
    %v101 = vrot.slane %v96, %v100
    %v107 = vunpack.c.l.b16 %v92
    %v108 = vunpack.c.l.b16 %v93
    %v109 = vunpack.c.l.b16 %v94
    %v110 = vunpack.c.l.b16 %v95
    %v111 = vpack.c.b16 %v108, %v107
    %v112 = vpack.c.b16 %v110, %v109
    %v116 = vsel %vm46, %v91, 0
    %118 = vmatprep.subr.bf16.mxu0 0
    %119 = vmatpush1.bf16.msra.mxu0 %v111
    %120 = vmatprep.subr.bf16.mxu0 0
    %121 = vmatpush1.bf16.msra.mxu0 %v112
    %122 = vmatprep.subr.bf16.mxu0 0
    %123 = vmatpush1.bf16.msra.mxu0 0
    %124 = vmatprep.subr.bf16.mxu0 0
    %125 = vmatpush1.bf16.msra.mxu0 0
    %126 = vmatprep.subr.bf16.mxu0 0
    %127 = vmatpush1.bf16.msra.mxu0 0
    %128 = vmatprep.subr.bf16.mxu0 0
    %129 = vmatpush1.bf16.msra.mxu0 0
    %130 = vmatprep.subr.bf16.mxu0 0
    %131 = vmatpush1.bf16.msra.mxu0 0
    %132 = vmatprep.subr.bf16.mxu0 0
    %133 = vmatpush1.bf16.msra.mxu0 0
    %134 = vmatprep.subr.bf16.mxu0 0
    %135 = vmatpush1.bf16.msra.mxu0 0
    %136 = vmatprep.subr.bf16.mxu0 0
    %137 = vmatpush1.bf16.msra.mxu0 0
    %138 = vmatprep.subr.bf16.mxu0 0
    %139 = vmatpush1.bf16.msra.mxu0 0
    %140 = vmatprep.subr.bf16.mxu0 0
    %141 = vmatpush1.bf16.msra.mxu0 0
    %142 = vmatprep.subr.bf16.mxu0 0
    %143 = vmatpush1.bf16.msra.mxu0 0
    %144 = vmatprep.subr.bf16.mxu0 0
    %145 = vmatpush1.bf16.msra.mxu0 0
    %146 = vmatprep.subr.bf16.mxu0 0
    %147 = vmatpush1.bf16.msra.mxu0 0
    %148 = vmatprep.subr.bf16.mxu0 0
    %149 = vmatpush1.bf16.msra.mxu0 0
    %150 = vmatprep.mubr.bf16.mxu0 0
    %151 = vmatmul.mubr.bf16.gmra.mrb[0].mxu0 %v116
    %v152 = vpop.f32.mrb[0].mxu0
    %v153 = vadd.f32 %v101, %v152
    %v154 = vpop.f32.mrb[0].mxu0
    %v155 = vpop.f32.mrb[0].mxu0
    %v156 = vpop.f32.mrb[0].mxu0
    %157 = vdwg.mxu0
    %vm158 = vcmask 17408
    %159 = vst.msk [vmem:[#allocation2] sm:$0x3] %vm158, %v153
    // Predicated region
    $region22: #{transformer_classifier_forward.19} parent=1 // pred_check
      _
    $region23: #{transformer_classifier_forward.19} parent=1 // pred_check_branch
      %161 = sbr.rel (0) target = $region25
    $region24: #{transformer_classifier_forward.19} parent=1 // pred_region
      %s163 = ssub.s32 32, 32
      %164 = vsyncadd [#allocation3], %s163
      %s166 = sshll.u32 [#allocation2], 4
      %s167 = int_to_ptr.vmem [resolvable:$true] %s166
      %169 = dma.vmem_to_hbm [thread:$0]  %s167, 32, %s5, [#allocation3]
    $region25: #{transformer_classifier_forward.19} parent=1 // pred_fallthru
      _
    // Predicated region
    $region26: #{transformer_classifier_forward.19} parent=1 // pred_check
      _
    $region27: #{transformer_classifier_forward.19} parent=1 // pred_check_branch
      %171 = sbr.rel (0) target = $region29
    $region28: #{transformer_classifier_forward.19} parent=1 // pred_region
      %172 = dma.done [#allocation3], 32
    $region29: #{transformer_classifier_forward.19} parent=1 // pred_fallthru
      _
    %173 = vsyncpa [#allocation3], 1

// kernel: transformer_classifier_forward.14
$region0: #{transformer_classifier_forward.14}
  #allocation0 [shape = 'u32[]', space=smem, size = 0x4, offset = 0x4, fixed_abs, tag = 'smem constant byte address 0x4 - core index']
  #allocation1 [shape = 'u32[144,128]{1,0:T(1,128)}', space=vmem, size = 0x12000, scoped, tag = 'internal scratch']
  #allocation2 [shape = 'f32[16,32]{1,0:T(8,128)}', space=vmem, size = 0x2000, scoped, tag = 'scratch operand']
  %s0 = inlined_call_operand.vmem [shape: bf16[16,32], index: 0, kind: input, shape index: {}]
  %s1 = inlined_call_operand.vmem [shape: bf16[32,64], index: 1, kind: input, shape index: {}]
  %s2 = inlined_call_operand.vmem [shape: f32[1,64], index: 2, kind: input, shape index: {}]
  %s3 = inlined_call_operand.vmem [shape: bf16[64,32], index: 3, kind: input, shape index: {}]
  %s4 = inlined_call_operand.vmem [shape: f32[1,32], index: 4, kind: input, shape index: {}]
  %s5 = inlined_call_operand.vmem [shape: f32[1,32], index: 5, kind: input, shape index: {}]
  %s6 = inlined_call_operand.vmem [shape: f32[1,32], index: 6, kind: input, shape index: {}]
  %s7 = inlined_call_operand.vmem [shape: bf16[16,32], index: 7, kind: output, shape index: {}]
  %s8 = sld [smem:[#allocation0]]
  $region46: #{transformer_classifier_forward.14} parent=0
    _
  %s10 = ssub.s32 1, %s8
  %s11 = scalar_select 0, %s10, %s8
  // Predicated region
  $region2: #{transformer_classifier_forward.14} parent=0 // pred_check
    _
  $region3: #{transformer_classifier_forward.14} parent=0 // pred_check_branch
    %13 = sbr.rel (0) target = $region5
  $region4: #{transformer_classifier_forward.14} parent=0 // pred_region
    _
  $region5: #{transformer_classifier_forward.14} parent=0 // pred_fallthru
    _
  // Predicated region
  $region6: #{transformer_classifier_forward.14} parent=0 // pred_check
    _
  $region7: #{transformer_classifier_forward.14} parent=0 // pred_check_branch
    %15 = sbr.rel (0) target = $region9
  $region8: #{transformer_classifier_forward.14} parent=0 // pred_region
    _
  $region9: #{transformer_classifier_forward.14} parent=0 // pred_fallthru
    _
  // Predicated region
  $region10: #{transformer_classifier_forward.14} parent=0 // pred_check
    _
  $region11: #{transformer_classifier_forward.14} parent=0 // pred_check_branch
    %17 = sbr.rel (0) target = $region13
  $region12: #{transformer_classifier_forward.14} parent=0 // pred_region
    _
  $region13: #{transformer_classifier_forward.14} parent=0 // pred_fallthru
    _
  // Predicated region
  $region14: #{transformer_classifier_forward.14} parent=0 // pred_check
    _
  $region15: #{transformer_classifier_forward.14} parent=0 // pred_check_branch
    %19 = sbr.rel (0) target = $region17
  $region16: #{transformer_classifier_forward.14} parent=0 // pred_region
    _
  $region17: #{transformer_classifier_forward.14} parent=0 // pred_fallthru
    _
  // Predicated region
  $region18: #{transformer_classifier_forward.14} parent=0 // pred_check
    _
  $region19: #{transformer_classifier_forward.14} parent=0 // pred_check_branch
    %21 = sbr.rel (0) target = $region21
  $region20: #{transformer_classifier_forward.14} parent=0 // pred_region
    _
  $region21: #{transformer_classifier_forward.14} parent=0 // pred_fallthru
    _
  // Predicated region
  $region22: #{transformer_classifier_forward.14} parent=0 // pred_check
    _
  $region23: #{transformer_classifier_forward.14} parent=0 // pred_check_branch
    %23 = sbr.rel (0) target = $region25
  $region24: #{transformer_classifier_forward.14} parent=0 // pred_region
    _
  $region25: #{transformer_classifier_forward.14} parent=0 // pred_fallthru
    _
  // Predicated region
  $region26: #{transformer_classifier_forward.14} parent=0 // pred_check
    _
  $region27: #{transformer_classifier_forward.14} parent=0 // pred_check_branch
    %25 = sbr.rel (0) target = $region29
  $region28: #{transformer_classifier_forward.14} parent=0 // pred_region
    _
  $region29: #{transformer_classifier_forward.14} parent=0 // pred_fallthru
    _
  %p27 = scmp.eq.s32.totalorder 0, 0
  // Predicated region
  $region30: #{transformer_classifier_forward.14} parent=0 // pred_check
    %p28 = pneg %p27
  $region31: #{transformer_classifier_forward.14} parent=0 // pred_check_branch
    %30 = sbr.rel (%p28) target = $region33
  $region32: #{transformer_classifier_forward.14} parent=0 // pred_region
    %vm31 = vcmask 261120
    %32 = vst.msk [vmem:[#allocation2] sm:$0xff] %vm31, 0.0
    %33 = vst.msk [vmem:[#allocation2 + $0x8] sm:$0xff] %vm31, 0.0
  $region33: #{transformer_classifier_forward.14} parent=0 // pred_fallthru
    _
  %v34 = vld [vmem:[%s0] sm:$0xf]
  %v35 = vld [vmem:[%s0 + $0x4] sm:$0xf]
  %v36 = vld [vmem:[%s1] sm:$0xf]
  %v37 = vld [vmem:[%s1 + $0x4] sm:$0xf]
  %v38 = vld [vmem:[%s1 + $0x8] sm:$0xf]
  %v39 = vld [vmem:[%s1 + $0xc] sm:$0xf]
  %v40 = vld [vmem:[%s2] sm:$0x1]
  %v42 = vlaneseq
  %v43 = vshrl.u32 %v42, 7
  %v44 = vsub.s32 0, %v43
  %v45 = vrot.slane %v40, %v44
  %v49 = vunpack.c.l.b16 %v34
  %v50 = vunpack.c.l.b16 %v35
  %v51 = vpack.c.b16 %v50, %v49
  %v56 = vunpack.c.l.b16 %v36
  %v57 = vunpack.c.l.b16 %v37
  %v58 = vunpack.c.l.b16 %v38
  %v59 = vunpack.c.l.b16 %v39
  %v60 = vpack.c.b16 %v57, %v56
  %v61 = vpack.c.b16 %v59, %v58
  %vm64 = vcmask 261120
  %v66 = vsel %vm64, %v51, 0
  %68 = vmatprep.subr.bf16.mxu0 0
  %69 = vmatpush1.bf16.msra.mxu0 %v60
  %70 = vmatprep.subr.bf16.mxu0 0
  %71 = vmatpush1.bf16.msra.mxu0 %v61
  %72 = vmatprep.subr.bf16.mxu0 0
  %73 = vmatpush1.bf16.msra.mxu0 0
  %74 = vmatprep.subr.bf16.mxu0 0
  %75 = vmatpush1.bf16.msra.mxu0 0
  %76 = vmatprep.subr.bf16.mxu0 0
  %77 = vmatpush1.bf16.msra.mxu0 0
  %78 = vmatprep.subr.bf16.mxu0 0
  %79 = vmatpush1.bf16.msra.mxu0 0
  %80 = vmatprep.subr.bf16.mxu0 0
  %81 = vmatpush1.bf16.msra.mxu0 0
  %82 = vmatprep.subr.bf16.mxu0 0
  %83 = vmatpush1.bf16.msra.mxu0 0
  %84 = vmatprep.subr.bf16.mxu0 0
  %85 = vmatpush1.bf16.msra.mxu0 0
  %86 = vmatprep.subr.bf16.mxu0 0
  %87 = vmatpush1.bf16.msra.mxu0 0
  %88 = vmatprep.subr.bf16.mxu0 0
  %89 = vmatpush1.bf16.msra.mxu0 0
  %90 = vmatprep.subr.bf16.mxu0 0
  %91 = vmatpush1.bf16.msra.mxu0 0
  %92 = vmatprep.subr.bf16.mxu0 0
  %93 = vmatpush1.bf16.msra.mxu0 0
  %94 = vmatprep.subr.bf16.mxu0 0
  %95 = vmatpush1.bf16.msra.mxu0 0
  %96 = vmatprep.subr.bf16.mxu0 0
  %97 = vmatpush1.bf16.msra.mxu0 0
  %98 = vmatprep.subr.bf16.mxu0 0
  %99 = vmatpush1.bf16.msra.mxu0 0
  %100 = vmatprep.mubr.bf16.mxu0 0
  %101 = vmatmul.mubr.bf16.gmra.mrb[0].mxu0 %v66
  %v102 = vpop.f32.mrb[0].mxu0
  %v103 = vadd.f32 %v45, %v102
  %v104 = vpop.f32.mrb[0].mxu0
  %v105 = vpop.f32.mrb[0].mxu0
  %v106 = vadd.f32 %v45, %v105
  %v107 = vpop.f32.mrb[0].mxu0
  %108 = vdwg.mxu0
  %v109 = vmul.f32 %v103, %v103
  %v110 = vmul.f32 %v106, %v106
  %v111 = vmul.f32 %v103, %v109
  %v112 = vmul.f32 %v106, %v110
  %v113 = vmul.f32 %v111, 0.044715
  %v114 = vmul.f32 %v112, 0.044715
  %v115 = vadd.f32 %v103, %v113
  %v116 = vadd.f32 %v106, %v114
  %v117 = vmul.f32 %v115, 0.7978846
  %v118 = vmul.f32 %v116, 0.7978846
  %v119 = vtanh.pop %v117
  %v120 = vtanh.pop %v118
  %v121 = vadd.f32 %v119, 1.0
  %v122 = vadd.f32 %v120, 1.0
  %v123 = vmul.f32 %v121, 0.5
  %v124 = vmul.f32 %v122, 0.5
  %v125 = vmul.f32 %v103, %v123
  %v126 = vmul.f32 %v106, %v124
  %v127 = vld [vmem:[#allocation2] sm:$0xff]
  %v128 = vld [vmem:[#allocation2 + $0x8] sm:$0xff]
  %v129 = vpack.c.bf16 %v126, %v125
  %v130 = vld [vmem:[%s3] sm:$0xf]
  %v131 = vld [vmem:[%s3 + $0x4] sm:$0xf]
  %v132 = vld [vmem:[%s3 + $0x8] sm:$0xf]
  %v133 = vld [vmem:[%s3 + $0xc] sm:$0xf]
  %v134 = vld [vmem:[%s3 + $0x10] sm:$0xf]
  %v135 = vld [vmem:[%s3 + $0x14] sm:$0xf]
  %v136 = vld [vmem:[%s3 + $0x18] sm:$0xf]
  %v137 = vld [vmem:[%s3 + $0x1c] sm:$0xf]
  %v146 = vunpack.c.l.b16 %v130
  %v147 = vunpack.c.l.b16 %v131
  %v148 = vunpack.c.l.b16 %v132
  %v149 = vunpack.c.l.b16 %v133
  %v150 = vunpack.c.l.b16 %v134
  %v151 = vunpack.c.l.b16 %v135
  %v152 = vunpack.c.l.b16 %v136
  %v153 = vunpack.c.l.b16 %v137
  %v154 = vpack.c.b16 %v147, %v146
  %v155 = vpack.c.b16 %v149, %v148
  %v156 = vpack.c.b16 %v151, %v150
  %v157 = vpack.c.b16 %v153, %v152
  %vm162 = vcmask 523264
  %v164 = vsel %vm162, %v129, 0
  %166 = vmatprep.subr.bf16.mxu0 0
  %167 = vmatpush1.bf16.msra.mxu0 %v154
  %168 = vmatprep.subr.bf16.mxu0 0
  %169 = vmatpush1.bf16.msra.mxu0 %v155
  %170 = vmatprep.subr.bf16.mxu0 0
  %171 = vmatpush1.bf16.msra.mxu0 %v156
  %172 = vmatprep.subr.bf16.mxu0 0
  %173 = vmatpush1.bf16.msra.mxu0 %v157
  %174 = vmatprep.subr.bf16.mxu0 0
  %175 = vmatpush1.bf16.msra.mxu0 0
  %176 = vmatprep.subr.bf16.mxu0 0
  %177 = vmatpush1.bf16.msra.mxu0 0
  %178 = vmatprep.subr.bf16.mxu0 0
  %179 = vmatpush1.bf16.msra.mxu0 0
  %180 = vmatprep.subr.bf16.mxu0 0
  %181 = vmatpush1.bf16.msra.mxu0 0
  %182 = vmatprep.subr.bf16.mxu0 0
  %183 = vmatpush1.bf16.msra.mxu0 0
  %184 = vmatprep.subr.bf16.mxu0 0
  %185 = vmatpush1.bf16.msra.mxu0 0
  %186 = vmatprep.subr.bf16.mxu0 0
  %187 = vmatpush1.bf16.msra.mxu0 0
  %188 = vmatprep.subr.bf16.mxu0 0
  %189 = vmatpush1.bf16.msra.mxu0 0
  %190 = vmatprep.subr.bf16.mxu0 0
  %191 = vmatpush1.bf16.msra.mxu0 0
  %192 = vmatprep.subr.bf16.mxu0 0
  %193 = vmatpush1.bf16.msra.mxu0 0
  %194 = vmatprep.subr.bf16.mxu0 0
  %195 = vmatpush1.bf16.msra.mxu0 0
  %196 = vmatprep.subr.bf16.mxu0 0
  %197 = vmatpush1.bf16.msra.mxu0 0
  %198 = vmatprep.mubr.bf16.mxu0 0
  %199 = vmatmul.mubr.bf16.gmra.mrb[0].mxu0 %v164
  %v200 = vpop.f32.mrb[0].mxu0
  %v201 = vadd.f32 0.0, %v200
  %v202 = vpop.f32.mrb[0].mxu0
  %v203 = vpop.f32.mrb[0].mxu0
  %v204 = vadd.f32 0.0, %v203
  %v205 = vpop.f32.mrb[0].mxu0
  %206 = vdwg.mxu0
  %v207 = vadd.f32 %v127, %v201
  %v208 = vadd.f32 %v128, %v204
  %209 = vst.msk [vmem:[#allocation2] sm:$0xff] %vm64, %v207
  %210 = vst.msk [vmem:[#allocation2 + $0x8] sm:$0xff] %vm64, %v208
  // Predicated region
  $region34: #{transformer_classifier_forward.14} parent=0 // pred_check
    %p211 = pneg %p27
  $region35: #{transformer_classifier_forward.14} parent=0 // pred_check_branch
    %213 = sbr.rel (%p211) target = $region37
  $region36: #{transformer_classifier_forward.14} parent=0 // pred_region
    %v214 = vld [vmem:[#allocation2] sm:$0xff]
    %v215 = vld [vmem:[#allocation2 + $0x8] sm:$0xff]
    %v216 = vld [vmem:[%s4] sm:$0x1]
    %v218 = vlaneseq
    %v219 = vshrl.u32 %v218, 7
    %v220 = vsub.s32 0, %v219
    %v221 = vrot.slane %v216, %v220
    %v223 = vadd.f32 %v214, %v221
    %v224 = vadd.f32 %v215, %v221
    %v225 = vld [vmem:[%s0] sm:$0xf]
    %v226 = vld [vmem:[%s0 + $0x4] sm:$0xf]
    %v227 = vunpack.c.l.bf16 %v225
    %v228 = vunpack.c.l.bf16 %v226
    %v229 = vadd.f32 %v223, %v227
    %v230 = vadd.f32 %v224, %v228
    %v231 = vsel %vm64, %v229, 0.0
    %232 = vadd.xlane.f32.xlu0 %v231
    %v233 = vpop.xlane.xlu0 %232
    %v234 = vsel %vm64, %v230, 0.0
    %235 = vadd.xlane.f32.xlu0 %v234
    %v236 = vpop.xlane.xlu0 %235
    %v237 = vrcp.pop 32.0
    %v238 = vmul.f32 %v233, %v237
    %v239 = vmul.f32 %v236, %v237
    %v240 = vsub.f32 %v229, %v238
    %v241 = vsub.f32 %v230, %v239
    %v242 = vmul.f32 %v240, %v240
    %v243 = vmul.f32 %v241, %v241
    %v244 = vsel %vm64, %v242, 0.0
    %245 = vadd.xlane.f32.xlu0 %v244
    %v246 = vpop.xlane.xlu0 %245
    %v247 = vsel %vm64, %v243, 0.0
    %248 = vadd.xlane.f32.xlu0 %v247
    %v249 = vpop.xlane.xlu0 %248
    %v250 = vmul.f32 %v246, %v237
    %v251 = vmul.f32 %v249, %v237
    %v252 = vadd.f32 %v250, 1e-12
    %v253 = vadd.f32 %v251, 1e-12
    %v254 = vrsqrt.pop %v252
    %v255 = vrsqrt.pop %v253
    %v256 = vmul.f32 %v240, %v254
    %v257 = vmul.f32 %v241, %v255
    %v258 = vld [vmem:[%s5] sm:$0x1]
    %v260 = vlaneseq
    %v261 = vshrl.u32 %v260, 7
    %v262 = vsub.s32 0, %v261
    %v263 = vrot.slane %v258, %v262
    %v265 = vmul.f32 %v256, %v263
    %v266 = vmul.f32 %v257, %v263
    %v267 = vld [vmem:[%s6] sm:$0x1]
    %v269 = vlaneseq
    %v270 = vshrl.u32 %v269, 7
    %v271 = vsub.s32 0, %v270
    %v272 = vrot.slane %v267, %v271
    %v274 = vadd.f32 %v265, %v272
    %v275 = vadd.f32 %v266, %v272
    %v276 = vpack.c.bf16 %v275, %v274
    %v278 = vunpack.c.l.b16 %v276
    %v279 = vunpack.c.h.b16 %v276
    %v280 = vpack.c.b16 %v278, %v278
    %v281 = vpack.c.b16 %v279, %v279
    %vm284 = vcmask 257024
    %285 = vst.msk [vmem:[%s7] sm:$0xf] %vm284, %v280
    %286 = vst.msk [vmem:[%s7 + $0x4] sm:$0xf] %vm284, %v281
  $region37: #{transformer_classifier_forward.14} parent=0 // pred_fallthru
    _
  // Predicated region
  $region38: #{transformer_classifier_forward.14} parent=0 // pred_check
    _
  $region39: #{transformer_classifier_forward.14} parent=0 // pred_check_branch
    %288 = sbr.rel (0) target = $region41
  $region40: #{transformer_classifier_forward.14} parent=0 // pred_region
    _
  $region41: #{transformer_classifier_forward.14} parent=0 // pred_fallthru
    _
  // Predicated region
  $region42: #{transformer_classifier_forward.14} parent=0 // pred_check
    _
  $region43: #{transformer_classifier_forward.14} parent=0 // pred_check_branch
    %290 = sbr.rel (0) target = $region45
  $region44: #{transformer_classifier_forward.14} parent=0 // pred_region
    _
  $region45: #{transformer_classifier_forward.14} parent=0 // pred_fallthru
    _

</llo_original>
